<compile_context>
chip_gen: v7x
topology: tpu7x:2x2x1
jax: 0.10.0
libtpu: 0.0.40
codegen_flags: <defaults>
</compile_context>

<pallas_src>
import functools

import jax
import jax.numpy as jnp
from jax.experimental import pallas as pl
from jax.experimental.pallas import tpu as pltpu


# ---------------------------------------------------------------------------
# Trace-time weight preparation (pure JAX on tiny tensors)
# ---------------------------------------------------------------------------
def _compose_depth_weights(params):
    """Compose the three depth convs (k=3,s=2 / k=3,s=2 / k=4,s=4) into a single
    19-tap depth conv.  Stage weights are (kd, C_in, C_out), row-vec y = x @ W."""
    w1, w2, w3 = params["w1"], params["w2"], params["w3"]
    b1, b2, b3 = params["b1"], params["b2"], params["b3"]
    c = w1.shape[1]
    k1, k2, k3 = w1.shape[0], w2.shape[0], w3.shape[0]        # 3, 3, 4
    n_taps = (k1 - 1) + 2 * (k2 - 1) + 4 * (k3 - 1) + 1       # 19
    w_eff = jnp.zeros((n_taps, c, c), jnp.float32)
    for cc in range(k3):
        for bb in range(k2):
            for aa in range(k1):
                t = aa + 2 * bb + 4 * cc                      # strides 2, 2*2
                w_eff = w_eff.at[t].add(w1[aa] @ w2[bb] @ w3[cc])
    s2, s3 = w2.sum(axis=0), w3.sum(axis=0)
    b_eff = b1 @ s2 @ s3 + b2 @ s3 + b3                       # (1, C)
    return w_eff, b_eff, n_taps


def _build_depth_matrix(w_eff, n_taps, c, d, w):
    """(C*D*W, C*W) bf16 with Wdep[ci*D*W + t*W + x, co*W + x] = w_eff[t,ci,co]
    (zero for t >= n_taps).  One MXU dot then produces the (H, C*W) slab."""
    eye_w = jnp.eye(w, dtype=jnp.float32)
    blk = jnp.einsum("tio,xy->itxoy", w_eff, eye_w)           # (C, taps, W, C, W)
    full = jnp.zeros((c, d, w, c, w), jnp.float32).at[:, :n_taps].set(blk)
    return full.reshape(c * d * w, c * w).astype(jnp.bfloat16)


def _fold_conv2d_step(w2d, b2d, hi, wi):
    """Fold one 3x3 / stride-2 / pad-1 Conv2d into slab-matmul operands:
       rsel  (3, ho, hi)      bf16  -- 0/1 row selection (top pad handled)
       wfold (3, C*wi, C*wo)  bf16  -- kw taps + width pad + channel mix
       brow  (1, C*wo)        f32   -- bias broadcast row."""
    c = w2d.shape[2]
    ho, wo = hi // 2, wi // 2
    kh = jnp.arange(3)[:, None, None]
    q = jnp.arange(ho)[None, :, None]
    r = jnp.arange(hi)[None, None, :]
    rsel = (r == 2 * q + kh - 1).astype(jnp.bfloat16)         # (3, ho, hi)
    kw = jnp.arange(3)[:, None, None]
    x = jnp.arange(wi)[None, :, None]
    v = jnp.arange(wo)[None, None, :]
    sel = (x == 2 * v + kw - 1).astype(jnp.float32)           # (3=kw, wi, wo)
    wfold = jnp.einsum("hkio,kxv->hixov", w2d, sel)           # (3, C, wi, C, wo)
    wfold = wfold.reshape(3, c * wi, c * wo).astype(jnp.bfloat16)
    brow = jnp.repeat(b2d.reshape(-1), wo)[None, :].astype(jnp.float32)
    return rsel, wfold, brow


def _pick_batch_block(n):
    """Batch-block size: amortize per-grid-step overhead but always keep >= 2
    grid blocks so both v7x TensorCores get work (N=2 -> nb=1, grid=(2,))."""
    for nb in (8, 4, 2):
        if n % nb == 0 and n // nb >= 2:
            return nb
    return 1


# ---------------------------------------------------------------------------
# The fused Pallas kernel (nb batch elements per grid step)
# ---------------------------------------------------------------------------
def _downsample_kernel(*refs, steps, nb):
    x_ref, wdep_ref, bdep_ref = refs[0], refs[1], refs[2]
    conv_refs = refs[3:3 + 3 * steps]
    o_ref = refs[3 + 3 * steps]
    f32, bf16 = jnp.float32, jnp.bfloat16

    for b in range(nb):
        # ---- depth stage: ONE bf16 dot -> slab a[r, co*W + x] (f32 acc) ----
        a = jnp.dot(x_ref[b], wdep_ref[...], preferred_element_type=f32)
        a = a + bdep_ref[...]                                  # bias, added once
        if steps == 0:
            o_ref[b] = a.astype(o_ref.dtype)
            continue

        # ---- conv2d steps: 6 bf16 dots per step, all padding pre-folded ----
        a = a.astype(bf16)
        for s in range(steps):
            rsel_ref = conv_refs[3 * s]                        # (3, ho, hi)
            wf_ref = conv_refs[3 * s + 1]                      # (3, C*wi, C*wo)
            bc_ref = conv_refs[3 * s + 2]                      # (1, C*wo)
            _, ho, _ = rsel_ref.shape
            cwo = wf_ref.shape[2]
            acc = jnp.zeros((ho, cwo), f32) + bc_ref[...]      # bias in the init
            for kh in range(3):
                rows = jnp.dot(rsel_ref[kh], a,                # exact row gather
                               preferred_element_type=f32)
                acc = acc + jnp.dot(rows.astype(bf16), wf_ref[kh],
                                    preferred_element_type=f32)
            if s == steps - 1:
                o_ref[b] = acc.astype(o_ref.dtype)             # one slab store
            else:
                a = acc.astype(bf16)


# ---------------------------------------------------------------------------
# Forward wrapper and parameter init
# ---------------------------------------------------------------------------
def init_params(key, c, steps):
    """Deterministic, PyTorch-like uniform(-1/sqrt(fan_in), 1/sqrt(fan_in))."""
    keys = jax.random.split(key, 6 + 2 * steps)

    def gen(k, shape, fan_in):
        bound = 1.0 / (fan_in ** 0.5)
        return jax.random.uniform(k, shape, jnp.float32, -bound, bound)

    params = {
        "w1": gen(keys[0], (3, c, c), c * 3), "b1": gen(keys[1], (1, c), c * 3),
        "w2": gen(keys[2], (3, c, c), c * 3), "b2": gen(keys[3], (1, c), c * 3),
        "w3": gen(keys[4], (4, c, c), c * 4), "b3": gen(keys[5], (1, c), c * 4),
        "blocks2d": [],
    }
    for s in range(steps):
        params["blocks2d"].append(
            (gen(keys[6 + 2 * s], (3, 3, c, c), c * 9),
             gen(keys[7 + 2 * s], (1, c), c * 9)))
    return params


def downsample_forward(x_ncdhw, params):
    n, c, d, h, w = x_ncdhw.shape
    steps = len(params["blocks2d"])

    # Depth must collapse to 1 so torch.squeeze(dim=2) is shape-preserving.
    d1 = (d - 3) // 2 + 1
    d2 = (d1 - 3) // 2 + 1
    d3 = (d2 - 4) // 4 + 1
    assert d3 == 1, "depth must collapse to 1 (torch.squeeze(dim=2))"
    w_eff, b_eff, n_taps = _compose_depth_weights(params)
    # Composition reads x depth indices 0..n_taps-1 (valid convs start at 0).
    assert d >= n_taps

    wdep = _build_depth_matrix(w_eff, n_taps, c, d, w)            # (C*D*W, C*W)
    bdep = jnp.repeat(b_eff.reshape(-1), w)[None, :].astype(jnp.float32)

    step_ops = []
    hi, wi = h, w
    for (wc, bc) in params["blocks2d"]:
        assert hi % 2 == 0 and wi % 2 == 0
        step_ops += list(_fold_conv2d_step(wc, bc, hi, wi))
        hi, wi = hi // 2, wi // 2

    # Wrapper-side layout plumbing: x -> (N, H, C*D*W) slab, bf16 (halves HBM).
    x2 = jnp.transpose(x_ncdhw, (0, 3, 1, 2, 4)).reshape(n, h, c * d * w)
    x2 = x2.astype(jnp.bfloat16)

    nb = _pick_batch_block(n)
    assert n % nb == 0

    in_specs = [
        pl.BlockSpec((nb, h, c * d * w), lambda i: (i, 0, 0)),
        pl.BlockSpec(wdep.shape, lambda i: (0, 0)),
        pl.BlockSpec(bdep.shape, lambda i: (0, 0)),
    ]
    for op in step_ops:
        if op.ndim == 3:
            in_specs.append(pl.BlockSpec(op.shape, lambda i: (0, 0, 0)))
        else:
            in_specs.append(pl.BlockSpec(op.shape, lambda i: (0, 0)))

    kernel = functools.partial(_downsample_kernel, steps=steps, nb=nb)
    out_slab = pl.pallas_call(
        kernel,
        out_shape=jax.ShapeDtypeStruct((n, hi, c * wi), x_ncdhw.dtype),
        grid=(n // nb,),
        in_specs=in_specs,
        out_specs=pl.BlockSpec((nb, hi, c * wi), lambda i: (i, 0, 0)),
        compiler_params=pltpu.CompilerParams(
            dimension_semantics=("parallel",),
            vmem_limit_bytes=32 * 1024 * 1024),   # actual use < 1 MiB (v7x-safe)
    )(x2, wdep, bdep, *step_ops)

    # Slab (N, ho, C*wo) -> NCHW, done outside the kernel (tiny XLA transpose).
    return out_slab.reshape(n, hi, c, wi).transpose(0, 2, 1, 3)


# ---------------------------------------------------------------------------
# Pure-JAX reference (lax.conv, f32, sequential convs) for correctness check
# ---------------------------------------------------------------------------
def downsample_reference(x_ncdhw, params):
    def conv3d(x, w, b, sd):
        w5 = jnp.transpose(w, (2, 1, 0))[:, :, :, None, None]   # (O,I,kd,1,1)
        y = jax.lax.conv_general_dilated(
            x, w5, window_strides=(sd, 1, 1), padding="VALID",
            dimension_numbers=("NCDHW", "OIDHW", "NCDHW"))
        return y + b.reshape(1, -1, 1, 1, 1)

    def conv2d(x, w, b):
        w4 = jnp.transpose(w, (3, 2, 0, 1))                      # (O,I,kh,kw)
        y = jax.lax.conv_general_dilated(
            x, w4, window_strides=(2, 2), padding=((1, 1), (1, 1)),
            dimension_numbers=("NCHW", "OIHW", "NCHW"))
        return y + b.reshape(1, -1, 1, 1)

    x = conv3d(x_ncdhw, params["w1"], params["b1"], 2)
    x = conv3d(x, params["w2"], params["b2"], 2)
    x = conv3d(x, params["w3"], params["b3"], 4)
    x = jnp.squeeze(x, axis=2)
    for (wc, bc) in params["blocks2d"]:
        x = conv2d(x, wc, bc)
    return x


if __name__ == "__main__":
    key = jax.random.PRNGKey(0)
    kx, kp = jax.random.split(key)

    # Shapes consistent with the module: depth 32 collapses to 1
    # (32 -k3s2-> 15 -k3s2-> 7 -k4s4-> 1), then 2 stride-2 Conv2d steps 16->8->4.
    N, C, D, H, W = 2, 4, 32, 16, 16
    STEPS = 2

    x = jax.random.normal(kx, (N, C, D, H, W), jnp.float32)
    params = init_params(kp, C, STEPS)

    fwd = jax.jit(downsample_forward)
    out = jax.block_until_ready(fwd(x, params))

    ref = downsample_reference(x, params)
    assert out.shape == (N, C, H // (2 ** STEPS), W // (2 ** STEPS)), out.shape
    max_err = float(jnp.max(jnp.abs(out - ref)))
    # bf16 operands (input, depth matrix, conv weights/activations) on the MXU
    # with f32 accumulation: re-validated tolerance, observed error << 2e-2.
    if not jnp.allclose(out, ref, rtol=2e-2, atol=2e-2):
        raise AssertionError(f"Pallas output mismatch vs lax.conv reference "
                             f"(max abs err {max_err})")
    print("KERNEL_OK")
</pallas_src>

<mosaic_0001>
module attributes {stable_mosaic.version = 11 : i64} {
  func.func @_downsample_kernel(%arg0: i32, %arg1: memref<1x16x2048xbf16, #tpu.memory_space<vmem>>, %arg2: memref<2048x64xbf16, #tpu.memory_space<vmem>>, %arg3: memref<1x64xf32, #tpu.memory_space<vmem>>, %arg4: memref<3x8x16xbf16, #tpu.memory_space<vmem>>, %arg5: memref<3x64x32xbf16, #tpu.memory_space<vmem>>, %arg6: memref<1x32xf32, #tpu.memory_space<vmem>>, %arg7: memref<3x4x8xbf16, #tpu.memory_space<vmem>>, %arg8: memref<3x32x16xbf16, #tpu.memory_space<vmem>>, %arg9: memref<1x16xf32, #tpu.memory_space<vmem>>, %arg10: memref<1x4x16xf32, #tpu.memory_space<vmem>>) attributes {dimension_semantics = [#tpu.dimension_semantics<parallel>], iteration_bounds = array<i64: 2>, scalar_prefetch = 0 : i64, scratch_operands = 0 : i64, tpu.core_type = #tpu.core_type<tc>, window_params = [{transform_indices = @transform_0, window_bounds = array<i64: 1, 16, 2048>}, {pipeline_mode = #tpu.pipeline_mode<synchronous>, transform_indices = @transform_1, window_bounds = array<i64: 2048, 64>}, {pipeline_mode = #tpu.pipeline_mode<synchronous>, transform_indices = @transform_2, window_bounds = array<i64: 1, 64>}, {pipeline_mode = #tpu.pipeline_mode<synchronous>, transform_indices = @transform_3, window_bounds = array<i64: 3, 8, 16>}, {pipeline_mode = #tpu.pipeline_mode<synchronous>, transform_indices = @transform_4, window_bounds = array<i64: 3, 64, 32>}, {pipeline_mode = #tpu.pipeline_mode<synchronous>, transform_indices = @transform_5, window_bounds = array<i64: 1, 32>}, {pipeline_mode = #tpu.pipeline_mode<synchronous>, transform_indices = @transform_6, window_bounds = array<i64: 3, 4, 8>}, {pipeline_mode = #tpu.pipeline_mode<synchronous>, transform_indices = @transform_7, window_bounds = array<i64: 3, 32, 16>}, {pipeline_mode = #tpu.pipeline_mode<synchronous>, transform_indices = @transform_8, window_bounds = array<i64: 1, 16>}, {transform_indices = @transform_9, window_bounds = array<i64: 1, 4, 16>}]} {
    %c0 = arith.constant 0 : index
    %c0_0 = arith.constant 0 : index
    %c0_1 = arith.constant 0 : index
    %0 = vector.load %arg1[%c0, %c0_0, %c0_1] : memref<1x16x2048xbf16, #tpu.memory_space<vmem>>, vector<1x16x2048xbf16>
    %1 = vector.shape_cast %0 : vector<1x16x2048xbf16> to vector<16x2048xbf16>
    %c0_2 = arith.constant 0 : index
    %c0_3 = arith.constant 0 : index
    %2 = vector.load %arg2[%c0_2, %c0_3] : memref<2048x64xbf16, #tpu.memory_space<vmem>>, vector<2048x64xbf16>
    %cst = arith.constant dense<0.000000e+00> : vector<16x64xf32>
    %3 = tpu.matmul %1, %2, %cst {dimension_numbers = #tpu.dot_dimension_numbers<[1], [0], [0], [1], [0, 0, 1, 1], [], []>} : vector<16x2048xbf16>, vector<2048x64xbf16>, vector<16x64xf32> -> vector<16x64xf32>
    %c0_4 = arith.constant 0 : index
    %c0_5 = arith.constant 0 : index
    %4 = vector.load %arg3[%c0_4, %c0_5] : memref<1x64xf32, #tpu.memory_space<vmem>>, vector<1x64xf32>
    %5 = vector.broadcast %4 : vector<1x64xf32> to vector<16x64xf32>
    %6 = arith.addf %3, %5 : vector<16x64xf32>
    %7 = arith.truncf %6 : vector<16x64xf32> to vector<16x64xbf16>
    %cst_6 = arith.constant 0.000000e+00 : f32
    %8 = vector.broadcast %cst_6 : f32 to vector<8x32xf32>
    %c0_7 = arith.constant 0 : index
    %c0_8 = arith.constant 0 : index
    %9 = vector.load %arg6[%c0_7, %c0_8] : memref<1x32xf32, #tpu.memory_space<vmem>>, vector<1x32xf32>
    %10 = vector.broadcast %9 : vector<1x32xf32> to vector<8x32xf32>
    %11 = arith.addf %8, %10 : vector<8x32xf32>
    %c0_9 = arith.constant 0 : index
    %c0_10 = arith.constant 0 : index
    %c0_11 = arith.constant 0 : index
    %12 = vector.load %arg4[%c0_9, %c0_10, %c0_11] : memref<3x8x16xbf16, #tpu.memory_space<vmem>>, vector<1x8x16xbf16>
    %13 = vector.shape_cast %12 : vector<1x8x16xbf16> to vector<8x16xbf16>
    %cst_12 = arith.constant dense<0.000000e+00> : vector<8x64xf32>
    %14 = tpu.matmul %13, %7, %cst_12 {dimension_numbers = #tpu.dot_dimension_numbers<[1], [0], [0], [1], [0, 0, 1, 1], [], []>} : vector<8x16xbf16>, vector<16x64xbf16>, vector<8x64xf32> -> vector<8x64xf32>
    %15 = arith.truncf %14 : vector<8x64xf32> to vector<8x64xbf16>
    %c0_13 = arith.constant 0 : index
    %c0_14 = arith.constant 0 : index
    %c0_15 = arith.constant 0 : index
    %16 = vector.load %arg5[%c0_13, %c0_14, %c0_15] : memref<3x64x32xbf16, #tpu.memory_space<vmem>>, vector<1x64x32xbf16>
    %17 = vector.shape_cast %16 : vector<1x64x32xbf16> to vector<64x32xbf16>
    %cst_16 = arith.constant dense<0.000000e+00> : vector<8x32xf32>
    %18 = tpu.matmul %15, %17, %cst_16 {dimension_numbers = #tpu.dot_dimension_numbers<[1], [0], [0], [1], [0, 0, 1, 1], [], []>} : vector<8x64xbf16>, vector<64x32xbf16>, vector<8x32xf32> -> vector<8x32xf32>
    %19 = arith.addf %11, %18 : vector<8x32xf32>
    %c1 = arith.constant 1 : index
    %c0_17 = arith.constant 0 : index
    %c0_18 = arith.constant 0 : index
    %20 = vector.load %arg4[%c1, %c0_17, %c0_18] : memref<3x8x16xbf16, #tpu.memory_space<vmem>>, vector<1x8x16xbf16>
    %21 = vector.shape_cast %20 : vector<1x8x16xbf16> to vector<8x16xbf16>
    %cst_19 = arith.constant dense<0.000000e+00> : vector<8x64xf32>
    %22 = tpu.matmul %21, %7, %cst_19 {dimension_numbers = #tpu.dot_dimension_numbers<[1], [0], [0], [1], [0, 0, 1, 1], [], []>} : vector<8x16xbf16>, vector<16x64xbf16>, vector<8x64xf32> -> vector<8x64xf32>
    %23 = arith.truncf %22 : vector<8x64xf32> to vector<8x64xbf16>
    %c1_20 = arith.constant 1 : index
    %c0_21 = arith.constant 0 : index
    %c0_22 = arith.constant 0 : index
    %24 = vector.load %arg5[%c1_20, %c0_21, %c0_22] : memref<3x64x32xbf16, #tpu.memory_space<vmem>>, vector<1x64x32xbf16>
    %25 = vector.shape_cast %24 : vector<1x64x32xbf16> to vector<64x32xbf16>
    %cst_23 = arith.constant dense<0.000000e+00> : vector<8x32xf32>
    %26 = tpu.matmul %23, %25, %cst_23 {dimension_numbers = #tpu.dot_dimension_numbers<[1], [0], [0], [1], [0, 0, 1, 1], [], []>} : vector<8x64xbf16>, vector<64x32xbf16>, vector<8x32xf32> -> vector<8x32xf32>
    %27 = arith.addf %19, %26 : vector<8x32xf32>
    %c2 = arith.constant 2 : index
    %c0_24 = arith.constant 0 : index
    %c0_25 = arith.constant 0 : index
    %28 = vector.load %arg4[%c2, %c0_24, %c0_25] : memref<3x8x16xbf16, #tpu.memory_space<vmem>>, vector<1x8x16xbf16>
    %29 = vector.shape_cast %28 : vector<1x8x16xbf16> to vector<8x16xbf16>
    %cst_26 = arith.constant dense<0.000000e+00> : vector<8x64xf32>
    %30 = tpu.matmul %29, %7, %cst_26 {dimension_numbers = #tpu.dot_dimension_numbers<[1], [0], [0], [1], [0, 0, 1, 1], [], []>} : vector<8x16xbf16>, vector<16x64xbf16>, vector<8x64xf32> -> vector<8x64xf32>
    %31 = arith.truncf %30 : vector<8x64xf32> to vector<8x64xbf16>
    %c2_27 = arith.constant 2 : index
    %c0_28 = arith.constant 0 : index
    %c0_29 = arith.constant 0 : index
    %32 = vector.load %arg5[%c2_27, %c0_28, %c0_29] : memref<3x64x32xbf16, #tpu.memory_space<vmem>>, vector<1x64x32xbf16>
    %33 = vector.shape_cast %32 : vector<1x64x32xbf16> to vector<64x32xbf16>
    %cst_30 = arith.constant dense<0.000000e+00> : vector<8x32xf32>
    %34 = tpu.matmul %31, %33, %cst_30 {dimension_numbers = #tpu.dot_dimension_numbers<[1], [0], [0], [1], [0, 0, 1, 1], [], []>} : vector<8x64xbf16>, vector<64x32xbf16>, vector<8x32xf32> -> vector<8x32xf32>
    %35 = arith.addf %27, %34 : vector<8x32xf32>
    %36 = arith.truncf %35 : vector<8x32xf32> to vector<8x32xbf16>
    %cst_31 = arith.constant 0.000000e+00 : f32
    %37 = vector.broadcast %cst_31 : f32 to vector<4x16xf32>
    %c0_32 = arith.constant 0 : index
    %c0_33 = arith.constant 0 : index
    %38 = vector.load %arg9[%c0_32, %c0_33] : memref<1x16xf32, #tpu.memory_space<vmem>>, vector<1x16xf32>
    %39 = vector.broadcast %38 : vector<1x16xf32> to vector<4x16xf32>
    %40 = arith.addf %37, %39 : vector<4x16xf32>
    %c0_34 = arith.constant 0 : index
    %c0_35 = arith.constant 0 : index
    %c0_36 = arith.constant 0 : index
    %41 = vector.load %arg7[%c0_34, %c0_35, %c0_36] : memref<3x4x8xbf16, #tpu.memory_space<vmem>>, vector<1x4x8xbf16>
    %42 = vector.shape_cast %41 : vector<1x4x8xbf16> to vector<4x8xbf16>
    %cst_37 = arith.constant dense<0.000000e+00> : vector<4x32xf32>
    %43 = tpu.matmul %42, %36, %cst_37 {dimension_numbers = #tpu.dot_dimension_numbers<[1], [0], [0], [1], [0, 0, 1, 1], [], []>} : vector<4x8xbf16>, vector<8x32xbf16>, vector<4x32xf32> -> vector<4x32xf32>
    %44 = arith.truncf %43 : vector<4x32xf32> to vector<4x32xbf16>
    %c0_38 = arith.constant 0 : index
    %c0_39 = arith.constant 0 : index
    %c0_40 = arith.constant 0 : index
    %45 = vector.load %arg8[%c0_38, %c0_39, %c0_40] : memref<3x32x16xbf16, #tpu.memory_space<vmem>>, vector<1x32x16xbf16>
    %46 = vector.shape_cast %45 : vector<1x32x16xbf16> to vector<32x16xbf16>
    %cst_41 = arith.constant dense<0.000000e+00> : vector<4x16xf32>
    %47 = tpu.matmul %44, %46, %cst_41 {dimension_numbers = #tpu.dot_dimension_numbers<[1], [0], [0], [1], [0, 0, 1, 1], [], []>} : vector<4x32xbf16>, vector<32x16xbf16>, vector<4x16xf32> -> vector<4x16xf32>
    %48 = arith.addf %40, %47 : vector<4x16xf32>
    %c1_42 = arith.constant 1 : index
    %c0_43 = arith.constant 0 : index
    %c0_44 = arith.constant 0 : index
    %49 = vector.load %arg7[%c1_42, %c0_43, %c0_44] : memref<3x4x8xbf16, #tpu.memory_space<vmem>>, vector<1x4x8xbf16>
    %50 = vector.shape_cast %49 : vector<1x4x8xbf16> to vector<4x8xbf16>
    %cst_45 = arith.constant dense<0.000000e+00> : vector<4x32xf32>
    %51 = tpu.matmul %50, %36, %cst_45 {dimension_numbers = #tpu.dot_dimension_numbers<[1], [0], [0], [1], [0, 0, 1, 1], [], []>} : vector<4x8xbf16>, vector<8x32xbf16>, vector<4x32xf32> -> vector<4x32xf32>
    %52 = arith.truncf %51 : vector<4x32xf32> to vector<4x32xbf16>
    %c1_46 = arith.constant 1 : index
    %c0_47 = arith.constant 0 : index
    %c0_48 = arith.constant 0 : index
    %53 = vector.load %arg8[%c1_46, %c0_47, %c0_48] : memref<3x32x16xbf16, #tpu.memory_space<vmem>>, vector<1x32x16xbf16>
    %54 = vector.shape_cast %53 : vector<1x32x16xbf16> to vector<32x16xbf16>
    %cst_49 = arith.constant dense<0.000000e+00> : vector<4x16xf32>
    %55 = tpu.matmul %52, %54, %cst_49 {dimension_numbers = #tpu.dot_dimension_numbers<[1], [0], [0], [1], [0, 0, 1, 1], [], []>} : vector<4x32xbf16>, vector<32x16xbf16>, vector<4x16xf32> -> vector<4x16xf32>
    %56 = arith.addf %48, %55 : vector<4x16xf32>
    %c2_50 = arith.constant 2 : index
    %c0_51 = arith.constant 0 : index
    %c0_52 = arith.constant 0 : index
    %57 = vector.load %arg7[%c2_50, %c0_51, %c0_52] : memref<3x4x8xbf16, #tpu.memory_space<vmem>>, vector<1x4x8xbf16>
    %58 = vector.shape_cast %57 : vector<1x4x8xbf16> to vector<4x8xbf16>
    %cst_53 = arith.constant dense<0.000000e+00> : vector<4x32xf32>
    %59 = tpu.matmul %58, %36, %cst_53 {dimension_numbers = #tpu.dot_dimension_numbers<[1], [0], [0], [1], [0, 0, 1, 1], [], []>} : vector<4x8xbf16>, vector<8x32xbf16>, vector<4x32xf32> -> vector<4x32xf32>
    %60 = arith.truncf %59 : vector<4x32xf32> to vector<4x32xbf16>
    %c2_54 = arith.constant 2 : index
    %c0_55 = arith.constant 0 : index
    %c0_56 = arith.constant 0 : index
    %61 = vector.load %arg8[%c2_54, %c0_55, %c0_56] : memref<3x32x16xbf16, #tpu.memory_space<vmem>>, vector<1x32x16xbf16>
    %62 = vector.shape_cast %61 : vector<1x32x16xbf16> to vector<32x16xbf16>
    %cst_57 = arith.constant dense<0.000000e+00> : vector<4x16xf32>
    %63 = tpu.matmul %60, %62, %cst_57 {dimension_numbers = #tpu.dot_dimension_numbers<[1], [0], [0], [1], [0, 0, 1, 1], [], []>} : vector<4x32xbf16>, vector<32x16xbf16>, vector<4x16xf32> -> vector<4x16xf32>
    %64 = arith.addf %56, %63 : vector<4x16xf32>
    %c0_58 = arith.constant 0 : index
    %c0_59 = arith.constant 0 : index
    %c0_60 = arith.constant 0 : index
    %65 = vector.load %arg10[%c0_58, %c0_59, %c0_60] : memref<1x4x16xf32, #tpu.memory_space<vmem>>, vector<1x4x16xf32>
    %66 = vector.shape_cast %65 : vector<1x4x16xf32> to vector<4x16xf32>
    %67 = vector.shape_cast %64 : vector<4x16xf32> to vector<1x4x16xf32>
    tpu.vector_store %arg10[%c0_58, %c0_59, %c0_60], %67 {strides = array<i32>} : memref<1x4x16xf32, #tpu.memory_space<vmem>>, vector<1x4x16xf32>,
    return
  }
  func.func @transform_0(%arg0: i32) -> (i32, i32, i32) {
    %c0_i32 = arith.constant 0 : i32
    %c0_i32_0 = arith.constant 0 : i32
    %c0_i32_1 = arith.constant 0 : i32
    return %arg0, %c0_i32, %c0_i32_0 : i32, i32, i32
  }
  func.func @transform_1(%arg0: i32) -> (i32, i32) {
    %c0_i32 = arith.constant 0 : i32
    %c0_i32_0 = arith.constant 0 : i32
    %c0_i32_1 = arith.constant 0 : i32
    return %c0_i32, %c0_i32_0 : i32, i32
  }
  func.func @transform_2(%arg0: i32) -> (i32, i32) {
    %c0_i32 = arith.constant 0 : i32
    %c0_i32_0 = arith.constant 0 : i32
    %c0_i32_1 = arith.constant 0 : i32
    return %c0_i32, %c0_i32_0 : i32, i32
  }
  func.func @transform_3(%arg0: i32) -> (i32, i32, i32) {
    %c0_i32 = arith.constant 0 : i32
    %c0_i32_0 = arith.constant 0 : i32
    %c0_i32_1 = arith.constant 0 : i32
    %c0_i32_2 = arith.constant 0 : i32
    return %c0_i32, %c0_i32_0, %c0_i32_1 : i32, i32, i32
  }
  func.func @transform_4(%arg0: i32) -> (i32, i32, i32) {
    %c0_i32 = arith.constant 0 : i32
    %c0_i32_0 = arith.constant 0 : i32
    %c0_i32_1 = arith.constant 0 : i32
    %c0_i32_2 = arith.constant 0 : i32
    return %c0_i32, %c0_i32_0, %c0_i32_1 : i32, i32, i32
  }
  func.func @transform_5(%arg0: i32) -> (i32, i32) {
    %c0_i32 = arith.constant 0 : i32
    %c0_i32_0 = arith.constant 0 : i32
    %c0_i32_1 = arith.constant 0 : i32
    return %c0_i32, %c0_i32_0 : i32, i32
  }
  func.func @transform_6(%arg0: i32) -> (i32, i32, i32) {
    %c0_i32 = arith.constant 0 : i32
    %c0_i32_0 = arith.constant 0 : i32
    %c0_i32_1 = arith.constant 0 : i32
    %c0_i32_2 = arith.constant 0 : i32
    return %c0_i32, %c0_i32_0, %c0_i32_1 : i32, i32, i32
  }
  func.func @transform_7(%arg0: i32) -> (i32, i32, i32) {
    %c0_i32 = arith.constant 0 : i32
    %c0_i32_0 = arith.constant 0 : i32
    %c0_i32_1 = arith.constant 0 : i32
    %c0_i32_2 = arith.constant 0 : i32
    return %c0_i32, %c0_i32_0, %c0_i32_1 : i32, i32, i32
  }
  func.func @transform_8(%arg0: i32) -> (i32, i32) {
    %c0_i32 = arith.constant 0 : i32
    %c0_i32_0 = arith.constant 0 : i32
    %c0_i32_1 = arith.constant 0 : i32
    return %c0_i32, %c0_i32_0 : i32, i32
  }
  func.func @transform_9(%arg0: i32) -> (i32, i32, i32) {
    %c0_i32 = arith.constant 0 : i32
    %c0_i32_0 = arith.constant 0 : i32
    %c0_i32_1 = arith.constant 0 : i32
    return %arg0, %c0_i32, %c0_i32_0 : i32, i32, i32
  }
}

</mosaic_0001>

<llo_original>
// kernel: downsample_forward.1
$region0: #{downsample_forward.1}
  #allocation0 [shape = 'u32[]', space=smem, size = 0x4, offset = 0x4, fixed_abs, tag = 'smem constant byte address 0x4 - core index']
  #allocation1 [shape = 'u32[144,128]{1,0:T(1,128)}', space=vmem, size = 0x12000, scoped, tag = 'internal scratch']
  %s0 = inlined_call_operand.vmem [shape: bf16[2,16,2048], index: 0, kind: input, shape index: {}]
  %s1 = inlined_call_operand.vmem [shape: bf16[2048,64], index: 1, kind: input, shape index: {}]
  %s2 = inlined_call_operand.vmem [shape: f32[1,64], index: 2, kind: input, shape index: {}]
  %s3 = inlined_call_operand.vmem [shape: bf16[3,8,16], index: 3, kind: input, shape index: {}]
  %s4 = inlined_call_operand.vmem [shape: bf16[3,64,32], index: 4, kind: input, shape index: {}]
  %s5 = inlined_call_operand.vmem [shape: f32[1,32], index: 5, kind: input, shape index: {}]
  %s6 = inlined_call_operand.vmem [shape: bf16[3,4,8], index: 6, kind: input, shape index: {}]
  %s7 = inlined_call_operand.vmem [shape: bf16[3,32,16], index: 7, kind: input, shape index: {}]
  %s8 = inlined_call_operand.vmem [shape: f32[1,16], index: 8, kind: input, shape index: {}]
  %s9 = inlined_call_operand.vmem [shape: f32[2,4,16], index: 9, kind: output, shape index: {}]
  %s10 = sld [smem:[#allocation0]]
  $region69: #{downsample_forward.1} parent=0
    _
  %s12 = ssub.s32 1, %s10
  %s13 = scalar_select 0, %s12, %s10
  loop: start=0, step=1, limit=4
  $region2: #{downsample_forward.1} parent=0 // loop_pre_header
    _
  $region3: #{downsample_forward.1} parent=0 // loop_header
    %s15 = sphi 0, %s19
    %p16 = scmp.ge.s32.totalorder %s15, 4
    %s25 = sphi 0, %s27
    %s28 = sphi 0, %s25
    %s29 = sphi 0, %s28
    %s45 = sphi 0, %s29
    %s49 = sphi 0, %s49
    %s51 = sphi 0, %s49
    %s52 = sphi 0, %s51
    %s66 = sphi 0, %s52
    %s70 = sphi 0, %s70
    %s72 = sphi 0, %s70
    %s73 = sphi 0, %s72
    %s87 = sphi 0, %s73
    %s91 = sphi 0, %s91
    %s93 = sphi 0, %s91
    %s94 = sphi 0, %s93
    %s108 = sphi 0, %s94
    %s112 = sphi 0, %s112
    %s114 = sphi 0, %s112
    %s115 = sphi 0, %s114
    %s129 = sphi 0, %s115
    %s133 = sphi 0, %s133
    %s135 = sphi 0, %s133
    %s136 = sphi 0, %s135
    %s150 = sphi 0, %s136
    %s154 = sphi 0, %s154
    %s156 = sphi 0, %s154
    %s157 = sphi 0, %s156
    %s171 = sphi 0, %s157
    %s175 = sphi 0, %s175
    %s177 = sphi 0, %s175
    %s178 = sphi 0, %s177
    %s192 = sphi 0, %s178
    %s196 = sphi 0, %s196
    %s198 = sphi 0, %s196
    %s199 = sphi 0, %s198
    %s213 = sphi 0, %s199
    %s219 = sphi 0, %s221
    %s222 = sphi 0, %s219
    %s223 = sphi 0, %s222
    %s239 = sphi 0, %s223
  $region4: #{downsample_forward.1} parent=0 // loop_header_branch
    %18 = sbr.rel (%p16) target = $region8
  $region5: #{downsample_forward.1} parent=0 // loop_body
    %s20 = ssub.s32 %s15, 1
    %s21 = ssub.s32 %s15, 2
    %s22 = sadd.s32 %s15, 1
    %s23 = ssub.s32 %s15, %s22
    %p24 = scmp.eq.s32.totalorder %s23, 0
    %s26 = sadd.s32 %s25, 1
    %s27 = scalar_select %p24, %s25, %s26
    %p30 = pneg %p24
    %p31 = scmp.eq.s32.totalorder %s15, 1
    %p32 = por %p30, %p31
    %p33 = scmp.ne.s32.totalorder %s25, %s28
    %p34 = scmp.eq.s32.totalorder %s15, 0
    %p35 = por %p33, %p34
    %p36 = scmp.ne.s32.totalorder %s25, %s28
    %p37 = scmp.eq.s32.totalorder %s20, 1
    %p38 = por %p36, %p37
    %p39 = scmp.ne.s32.totalorder %s28, %s29
    %p40 = scmp.eq.s32.totalorder %s20, 0
    %p41 = por %p39, %p40
    %p42 = scmp.ne.s32.totalorder %s28, %s29
    %p43 = scmp.eq.s32.totalorder %s21, 1
    %p44 = por %p42, %p43
    %p46 = scmp.ne.s32.totalorder %s29, %s45
    %p47 = scmp.eq.s32.totalorder %s21, 0
    %p48 = por %p46, %p47
    %s50 = sadd.s32 %s49, 1
    %p53 = scmp.eq.s32.totalorder %s15, 1
    %p54 = scmp.ne.s32.totalorder %s49, %s51
    %p55 = scmp.eq.s32.totalorder %s15, 0
    %p56 = por %p54, %p55
    %p57 = scmp.ne.s32.totalorder %s49, %s51
    %p58 = scmp.eq.s32.totalorder %s20, 1
    %p59 = por %p57, %p58
    %p60 = scmp.ne.s32.totalorder %s51, %s52
    %p61 = scmp.eq.s32.totalorder %s20, 0
    %p62 = por %p60, %p61
    %p63 = scmp.ne.s32.totalorder %s51, %s52
    %p64 = scmp.eq.s32.totalorder %s21, 1
    %p65 = por %p63, %p64
    %p67 = scmp.ne.s32.totalorder %s52, %s66
    %p68 = scmp.eq.s32.totalorder %s21, 0
    %p69 = por %p67, %p68
    %s71 = sadd.s32 %s70, 1
    %p74 = scmp.eq.s32.totalorder %s15, 1
    %p75 = scmp.ne.s32.totalorder %s70, %s72
    %p76 = scmp.eq.s32.totalorder %s15, 0
    %p77 = por %p75, %p76
    %p78 = scmp.ne.s32.totalorder %s70, %s72
    %p79 = scmp.eq.s32.totalorder %s20, 1
    %p80 = por %p78, %p79
    %p81 = scmp.ne.s32.totalorder %s72, %s73
    %p82 = scmp.eq.s32.totalorder %s20, 0
    %p83 = por %p81, %p82
    %p84 = scmp.ne.s32.totalorder %s72, %s73
    %p85 = scmp.eq.s32.totalorder %s21, 1
    %p86 = por %p84, %p85
    %p88 = scmp.ne.s32.totalorder %s73, %s87
    %p89 = scmp.eq.s32.totalorder %s21, 0
    %p90 = por %p88, %p89
    %s92 = sadd.s32 %s91, 1
    %p95 = scmp.eq.s32.totalorder %s15, 1
    %p96 = scmp.ne.s32.totalorder %s91, %s93
    %p97 = scmp.eq.s32.totalorder %s15, 0
    %p98 = por %p96, %p97
    %p99 = scmp.ne.s32.totalorder %s91, %s93
    %p100 = scmp.eq.s32.totalorder %s20, 1
    %p101 = por %p99, %p100
    %p102 = scmp.ne.s32.totalorder %s93, %s94
    %p103 = scmp.eq.s32.totalorder %s20, 0
    %p104 = por %p102, %p103
    %p105 = scmp.ne.s32.totalorder %s93, %s94
    %p106 = scmp.eq.s32.totalorder %s21, 1
    %p107 = por %p105, %p106
    %p109 = scmp.ne.s32.totalorder %s94, %s108
    %p110 = scmp.eq.s32.totalorder %s21, 0
    %p111 = por %p109, %p110
    %s113 = sadd.s32 %s112, 1
    %p116 = scmp.eq.s32.totalorder %s15, 1
    %p117 = scmp.ne.s32.totalorder %s112, %s114
    %p118 = scmp.eq.s32.totalorder %s15, 0
    %p119 = por %p117, %p118
    %p120 = scmp.ne.s32.totalorder %s112, %s114
    %p121 = scmp.eq.s32.totalorder %s20, 1
    %p122 = por %p120, %p121
    %p123 = scmp.ne.s32.totalorder %s114, %s115
    %p124 = scmp.eq.s32.totalorder %s20, 0
    %p125 = por %p123, %p124
    %p126 = scmp.ne.s32.totalorder %s114, %s115
    %p127 = scmp.eq.s32.totalorder %s21, 1
    %p128 = por %p126, %p127
    %p130 = scmp.ne.s32.totalorder %s115, %s129
    %p131 = scmp.eq.s32.totalorder %s21, 0
    %p132 = por %p130, %p131
    %s134 = sadd.s32 %s133, 1
    %p137 = scmp.eq.s32.totalorder %s15, 1
    %p138 = scmp.ne.s32.totalorder %s133, %s135
    %p139 = scmp.eq.s32.totalorder %s15, 0
    %p140 = por %p138, %p139
    %p141 = scmp.ne.s32.totalorder %s133, %s135
    %p142 = scmp.eq.s32.totalorder %s20, 1
    %p143 = por %p141, %p142
    %p144 = scmp.ne.s32.totalorder %s135, %s136
    %p145 = scmp.eq.s32.totalorder %s20, 0
    %p146 = por %p144, %p145
    %p147 = scmp.ne.s32.totalorder %s135, %s136
    %p148 = scmp.eq.s32.totalorder %s21, 1
    %p149 = por %p147, %p148
    %p151 = scmp.ne.s32.totalorder %s136, %s150
    %p152 = scmp.eq.s32.totalorder %s21, 0
    %p153 = por %p151, %p152
    %s155 = sadd.s32 %s154, 1
    %p158 = scmp.eq.s32.totalorder %s15, 1
    %p159 = scmp.ne.s32.totalorder %s154, %s156
    %p160 = scmp.eq.s32.totalorder %s15, 0
    %p161 = por %p159, %p160
    %p162 = scmp.ne.s32.totalorder %s154, %s156
    %p163 = scmp.eq.s32.totalorder %s20, 1
    %p164 = por %p162, %p163
    %p165 = scmp.ne.s32.totalorder %s156, %s157
    %p166 = scmp.eq.s32.totalorder %s20, 0
    %p167 = por %p165, %p166
    %p168 = scmp.ne.s32.totalorder %s156, %s157
    %p169 = scmp.eq.s32.totalorder %s21, 1
    %p170 = por %p168, %p169
    %p172 = scmp.ne.s32.totalorder %s157, %s171
    %p173 = scmp.eq.s32.totalorder %s21, 0
    %p174 = por %p172, %p173
    %s176 = sadd.s32 %s175, 1
    %p179 = scmp.eq.s32.totalorder %s15, 1
    %p180 = scmp.ne.s32.totalorder %s175, %s177
    %p181 = scmp.eq.s32.totalorder %s15, 0
    %p182 = por %p180, %p181
    %p183 = scmp.ne.s32.totalorder %s175, %s177
    %p184 = scmp.eq.s32.totalorder %s20, 1
    %p185 = por %p183, %p184
    %p186 = scmp.ne.s32.totalorder %s177, %s178
    %p187 = scmp.eq.s32.totalorder %s20, 0
    %p188 = por %p186, %p187
    %p189 = scmp.ne.s32.totalorder %s177, %s178
    %p190 = scmp.eq.s32.totalorder %s21, 1
    %p191 = por %p189, %p190
    %p193 = scmp.ne.s32.totalorder %s178, %s192
    %p194 = scmp.eq.s32.totalorder %s21, 0
    %p195 = por %p193, %p194
    %s197 = sadd.s32 %s196, 1
    %p200 = scmp.eq.s32.totalorder %s15, 1
    %p201 = scmp.ne.s32.totalorder %s196, %s198
    %p202 = scmp.eq.s32.totalorder %s15, 0
    %p203 = por %p201, %p202
    %p204 = scmp.ne.s32.totalorder %s196, %s198
    %p205 = scmp.eq.s32.totalorder %s20, 1
    %p206 = por %p204, %p205
    %p207 = scmp.ne.s32.totalorder %s198, %s199
    %p208 = scmp.eq.s32.totalorder %s20, 0
    %p209 = por %p207, %p208
    %p210 = scmp.ne.s32.totalorder %s198, %s199
    %p211 = scmp.eq.s32.totalorder %s21, 1
    %p212 = por %p210, %p211
    %p214 = scmp.ne.s32.totalorder %s199, %s213
    %p215 = scmp.eq.s32.totalorder %s21, 0
    %p216 = por %p214, %p215
    %s217 = ssub.s32 %s15, %s22
    %p218 = scmp.eq.s32.totalorder %s217, 0
    %s220 = sadd.s32 %s219, 1
    %s221 = scalar_select %p218, %s219, %s220
    %p224 = pneg %p218
    %p225 = scmp.eq.s32.totalorder %s15, 1
    %p226 = por %p224, %p225
    %p227 = scmp.ne.s32.totalorder %s219, %s222
    %p228 = scmp.eq.s32.totalorder %s15, 0
    %p229 = por %p227, %p228
    %p230 = scmp.ne.s32.totalorder %s219, %s222
    %p231 = scmp.eq.s32.totalorder %s20, 1
    %p232 = por %p230, %p231
    %p233 = scmp.ne.s32.totalorder %s222, %s223
    %p234 = scmp.eq.s32.totalorder %s20, 0
    %p235 = por %p233, %p234
    %p236 = scmp.ne.s32.totalorder %s222, %s223
    %p237 = scmp.eq.s32.totalorder %s21, 1
    %p238 = por %p236, %p237
    %p240 = scmp.ne.s32.totalorder %s223, %s239
    %p241 = scmp.eq.s32.totalorder %s21, 0
    %p242 = por %p240, %p241
    %p243 = scmp.le.s32.totalorder 1, %s15
    %p244 = scmp.lt.s32.totalorder %s15, 3
    %p245 = pnand %p243, %p244
    %p246 = pneg %p245
    // Predicated region
    $region9: #{downsample_forward.1} parent=5 // pred_check
      _
    $region10: #{downsample_forward.1} parent=5 // pred_check_branch
      %248 = sbr.rel (%p245) target = $region12
    $region11: #{downsample_forward.1} parent=5 // pred_region
      %s249 = ssub.s32 %s15, 1
      // Predicated region
      $region13: #{downsample_forward.1} parent=11 // pred_check
        %p250 = pneg %p62
      $region14: #{downsample_forward.1} parent=11 // pred_check_branch
        %252 = sbr.rel (%p250) target = $region16
      $region15: #{downsample_forward.1} parent=11 // pred_region
        _
      $region16: #{downsample_forward.1} parent=11 // pred_fallthru
        _
      // Predicated region
      $region17: #{downsample_forward.1} parent=11 // pred_check
        %p253 = pneg %p83
      $region18: #{downsample_forward.1} parent=11 // pred_check_branch
        %255 = sbr.rel (%p253) target = $region20
      $region19: #{downsample_forward.1} parent=11 // pred_region
        _
      $region20: #{downsample_forward.1} parent=11 // pred_fallthru
        _
      // Predicated region
      $region21: #{downsample_forward.1} parent=11 // pred_check
        %p256 = pneg %p104
      $region22: #{downsample_forward.1} parent=11 // pred_check_branch
        %258 = sbr.rel (%p256) target = $region24
      $region23: #{downsample_forward.1} parent=11 // pred_region
        _
      $region24: #{downsample_forward.1} parent=11 // pred_fallthru
        _
      // Predicated region
      $region25: #{downsample_forward.1} parent=11 // pred_check
        %p259 = pneg %p125
      $region26: #{downsample_forward.1} parent=11 // pred_check_branch
        %261 = sbr.rel (%p259) target = $region28
      $region27: #{downsample_forward.1} parent=11 // pred_region
        _
      $region28: #{downsample_forward.1} parent=11 // pred_fallthru
        _
      // Predicated region
      $region29: #{downsample_forward.1} parent=11 // pred_check
        %p262 = pneg %p146
      $region30: #{downsample_forward.1} parent=11 // pred_check_branch
        %264 = sbr.rel (%p262) target = $region32
      $region31: #{downsample_forward.1} parent=11 // pred_region
        _
      $region32: #{downsample_forward.1} parent=11 // pred_fallthru
        _
      // Predicated region
      $region33: #{downsample_forward.1} parent=11 // pred_check
        %p265 = pneg %p167
      $region34: #{downsample_forward.1} parent=11 // pred_check_branch
        %267 = sbr.rel (%p265) target = $region36
      $region35: #{downsample_forward.1} parent=11 // pred_region
        _
      $region36: #{downsample_forward.1} parent=11 // pred_fallthru
        _
      // Predicated region
      $region37: #{downsample_forward.1} parent=11 // pred_check
        %p268 = pneg %p188
      $region38: #{downsample_forward.1} parent=11 // pred_check_branch
        %270 = sbr.rel (%p268) target = $region40
      $region39: #{downsample_forward.1} parent=11 // pred_region
        _
      $region40: #{downsample_forward.1} parent=11 // pred_fallthru
        _
      // Predicated region
      $region41: #{downsample_forward.1} parent=11 // pred_check
        %p271 = pneg %p209
      $region42: #{downsample_forward.1} parent=11 // pred_check_branch
        %273 = sbr.rel (%p271) target = $region44
      $region43: #{downsample_forward.1} parent=11 // pred_region
        _
      $region44: #{downsample_forward.1} parent=11 // pred_fallthru
        _
    $region12: #{downsample_forward.1} parent=5 // pred_fallthru
      _
    %p274 = scmp.lt.s32.totalorder %s15, 2
    // Predicated region
    $region45: #{downsample_forward.1} parent=5 // pred_check
      %p275 = pneg %p274
    $region46: #{downsample_forward.1} parent=5 // pred_check_branch
      %277 = sbr.rel (%p275) target = $region48
    $region47: #{downsample_forward.1} parent=5 // pred_region
      // Predicated region
      $region49: #{downsample_forward.1} parent=47 // pred_check
        %p278 = pneg %p35
      $region50: #{downsample_forward.1} parent=47 // pred_check_branch
        %280 = sbr.rel (%p278) target = $region52
      $region51: #{downsample_forward.1} parent=47 // pred_region
        %p281 = scmp.lt.s32.totalorder %s15, 1
        %s282 = scalar_select %p281, %s15, 1
        %s283 = smul.addr %s282, 32
        %s284 = smul.addr %s283, 4
        %s285 = scalar_lea.vmem %s0, %s284
      $region52: #{downsample_forward.1} parent=47 // pred_fallthru
        _
    $region48: #{downsample_forward.1} parent=5 // pred_fallthru
      _
    %p286 = scmp.le.s32.totalorder 1, %s15
    %p287 = scmp.lt.s32.totalorder %s15, 3
    %p288 = pnand %p286, %p287
    %p289 = pneg %p288
    // Predicated region
    $region53: #{downsample_forward.1} parent=5 // pred_check
      _
    $region54: #{downsample_forward.1} parent=5 // pred_check_branch
      %291 = sbr.rel (%p288) target = $region56
    $region55: #{downsample_forward.1} parent=5 // pred_region
      %s292 = ssub.s32 %s15, 1
      %p293 = scmp.lt.s32.totalorder %s20, 1
      %s294 = scalar_select %p293, %s20, 1
      %s295 = smul.addr %s294, 32
      %s296 = smul.addr %s295, 4
      %s297 = scalar_lea.vmem %s0, %s296
      %p298 = pneg %p41
      %p299 = pneg %p38
      %p300 = pneg %p62
      %p301 = pneg %p59
      %p302 = pneg %p83
      %p303 = pneg %p80
      %p304 = pneg %p104
      %p305 = pneg %p101
      %p306 = pneg %p125
      %p307 = pneg %p122
      %p308 = pneg %p146
      %p309 = pneg %p143
      %p310 = pneg %p167
      %p311 = pneg %p164
      %p312 = pneg %p188
      %p313 = pneg %p185
      %p314 = pneg %p209
      %p315 = pneg %p206
      %p316 = pneg %p235
      %p317 = pneg %p232
      %p318 = scmp.lt.s32.totalorder %s20, 1
      %s319 = scalar_select %p318, %s20, 1
      %s320 = smul.addr %s319, 4
      %s321 = scalar_lea.vmem %s9, %s320
      %p322 = scmp.lt.s32.totalorder %s20, 1
      %s323 = scalar_select %p322, %s20, 1
      %s324 = smul.addr %s323, 32
      %s325 = smul.addr %s324, 4
      %s326 = scalar_lea.vmem %s0, %s325
      %p327 = scmp.lt.s32.totalorder %s20, 1
      %s328 = scalar_select %p327, %s20, 1
      %s329 = smul.addr %s328, 4
      %s330 = scalar_lea.vmem %s9, %s329
      %v332 = vld [vmem:[%s326] sm:$0xff]
      %v333 = vld [vmem:[%s326 + $0x8] sm:$0xff]
      %v334 = vld [vmem:[%s326 + $0x10] sm:$0xff]
      %v335 = vld [vmem:[%s326 + $0x18] sm:$0xff]
      %v336 = vld [vmem:[%s326 + $0x20] sm:$0xff]
      %v337 = vld [vmem:[%s326 + $0x28] sm:$0xff]
      %v338 = vld [vmem:[%s326 + $0x30] sm:$0xff]
      %v339 = vld [vmem:[%s326 + $0x38] sm:$0xff]
      %v340 = vld [vmem:[%s326 + $0x40] sm:$0xff]
      %v341 = vld [vmem:[%s326 + $0x48] sm:$0xff]
      %v342 = vld [vmem:[%s326 + $0x50] sm:$0xff]
      %v343 = vld [vmem:[%s326 + $0x58] sm:$0xff]
      %v344 = vld [vmem:[%s326 + $0x60] sm:$0xff]
      %v345 = vld [vmem:[%s326 + $0x68] sm:$0xff]
      %v346 = vld [vmem:[%s326 + $0x70] sm:$0xff]
      %v347 = vld [vmem:[%s326 + $0x78] sm:$0xff]
      %v348 = vld [vmem:[%s1] sm:$0xf]
      %v349 = vld [vmem:[%s1 + $0x4] sm:$0xf]
      %v350 = vld [vmem:[%s1 + $0x8] sm:$0xf]
      %v351 = vld [vmem:[%s1 + $0xc] sm:$0xf]
      %v352 = vld [vmem:[%s1 + $0x10] sm:$0xf]
      %v353 = vld [vmem:[%s1 + $0x14] sm:$0xf]
      %v354 = vld [vmem:[%s1 + $0x18] sm:$0xf]
      %v355 = vld [vmem:[%s1 + $0x1c] sm:$0xf]
      %v356 = vld [vmem:[%s1 + $0x20] sm:$0xf]
      %v357 = vld [vmem:[%s1 + $0x24] sm:$0xf]
      %v358 = vld [vmem:[%s1 + $0x28] sm:$0xf]
      %v359 = vld [vmem:[%s1 + $0x2c] sm:$0xf]
      %v360 = vld [vmem:[%s1 + $0x30] sm:$0xf]
      %v361 = vld [vmem:[%s1 + $0x34] sm:$0xf]
      %v362 = vld [vmem:[%s1 + $0x38] sm:$0xf]
      %v363 = vld [vmem:[%s1 + $0x3c] sm:$0xf]
      %v364 = vld [vmem:[%s1 + $0x40] sm:$0xf]
      %v365 = vld [vmem:[%s1 + $0x44] sm:$0xf]
      %v366 = vld [vmem:[%s1 + $0x48] sm:$0xf]
      %v367 = vld [vmem:[%s1 + $0x4c] sm:$0xf]
      %v368 = vld [vmem:[%s1 + $0x50] sm:$0xf]
      %v369 = vld [vmem:[%s1 + $0x54] sm:$0xf]
      %v370 = vld [vmem:[%s1 + $0x58] sm:$0xf]
      %v371 = vld [vmem:[%s1 + $0x5c] sm:$0xf]
      %v372 = vld [vmem:[%s1 + $0x60] sm:$0xf]
      %v373 = vld [vmem:[%s1 + $0x64] sm:$0xf]
      %v374 = vld [vmem:[%s1 + $0x68] sm:$0xf]
      %v375 = vld [vmem:[%s1 + $0x6c] sm:$0xf]
      %v376 = vld [vmem:[%s1 + $0x70] sm:$0xf]
      %v377 = vld [vmem:[%s1 + $0x74] sm:$0xf]
      %v378 = vld [vmem:[%s1 + $0x78] sm:$0xf]
      %v379 = vld [vmem:[%s1 + $0x7c] sm:$0xf]
      %v380 = vld [vmem:[%s1 + $0x80] sm:$0xf]
      %v381 = vld [vmem:[%s1 + $0x84] sm:$0xf]
      %v382 = vld [vmem:[%s1 + $0x88] sm:$0xf]
      %v383 = vld [vmem:[%s1 + $0x8c] sm:$0xf]
      %v384 = vld [vmem:[%s1 + $0x90] sm:$0xf]
      %v385 = vld [vmem:[%s1 + $0x94] sm:$0xf]
      %v386 = vld [vmem:[%s1 + $0x98] sm:$0xf]
      %v387 = vld [vmem:[%s1 + $0x9c] sm:$0xf]
      %v388 = vld [vmem:[%s1 + $0xa0] sm:$0xf]
      %v389 = vld [vmem:[%s1 + $0xa4] sm:$0xf]
      %v390 = vld [vmem:[%s1 + $0xa8] sm:$0xf]
      %v391 = vld [vmem:[%s1 + $0xac] sm:$0xf]
      %v392 = vld [vmem:[%s1 + $0xb0] sm:$0xf]
      %v393 = vld [vmem:[%s1 + $0xb4] sm:$0xf]
      %v394 = vld [vmem:[%s1 + $0xb8] sm:$0xf]
      %v395 = vld [vmem:[%s1 + $0xbc] sm:$0xf]
      %v396 = vld [vmem:[%s1 + $0xc0] sm:$0xf]
      %v397 = vld [vmem:[%s1 + $0xc4] sm:$0xf]
      %v398 = vld [vmem:[%s1 + $0xc8] sm:$0xf]
      %v399 = vld [vmem:[%s1 + $0xcc] sm:$0xf]
      %v400 = vld [vmem:[%s1 + $0xd0] sm:$0xf]
      %v401 = vld [vmem:[%s1 + $0xd4] sm:$0xf]
      %v402 = vld [vmem:[%s1 + $0xd8] sm:$0xf]
      %v403 = vld [vmem:[%s1 + $0xdc] sm:$0xf]
      %v404 = vld [vmem:[%s1 + $0xe0] sm:$0xf]
      %v405 = vld [vmem:[%s1 + $0xe4] sm:$0xf]
      %v406 = vld [vmem:[%s1 + $0xe8] sm:$0xf]
      %v407 = vld [vmem:[%s1 + $0xec] sm:$0xf]
      %v408 = vld [vmem:[%s1 + $0xf0] sm:$0xf]
      %v409 = vld [vmem:[%s1 + $0xf4] sm:$0xf]
      %v410 = vld [vmem:[%s1 + $0xf8] sm:$0xf]
      %v411 = vld [vmem:[%s1 + $0xfc] sm:$0xf]
      %v412 = vld [vmem:[%s1 + $0x100] sm:$0xf]
      %v413 = vld [vmem:[%s1 + $0x104] sm:$0xf]
      %v414 = vld [vmem:[%s1 + $0x108] sm:$0xf]
      %v415 = vld [vmem:[%s1 + $0x10c] sm:$0xf]
      %v416 = vld [vmem:[%s1 + $0x110] sm:$0xf]
      %v417 = vld [vmem:[%s1 + $0x114] sm:$0xf]
      %v418 = vld [vmem:[%s1 + $0x118] sm:$0xf]
      %v419 = vld [vmem:[%s1 + $0x11c] sm:$0xf]
      %v420 = vld [vmem:[%s1 + $0x120] sm:$0xf]
      %v421 = vld [vmem:[%s1 + $0x124] sm:$0xf]
      %v422 = vld [vmem:[%s1 + $0x128] sm:$0xf]
      %v423 = vld [vmem:[%s1 + $0x12c] sm:$0xf]
      %v424 = vld [vmem:[%s1 + $0x130] sm:$0xf]
      %v425 = vld [vmem:[%s1 + $0x134] sm:$0xf]
      %v426 = vld [vmem:[%s1 + $0x138] sm:$0xf]
      %v427 = vld [vmem:[%s1 + $0x13c] sm:$0xf]
      %v428 = vld [vmem:[%s1 + $0x140] sm:$0xf]
      %v429 = vld [vmem:[%s1 + $0x144] sm:$0xf]
      %v430 = vld [vmem:[%s1 + $0x148] sm:$0xf]
      %v431 = vld [vmem:[%s1 + $0x14c] sm:$0xf]
      %v432 = vld [vmem:[%s1 + $0x150] sm:$0xf]
      %v433 = vld [vmem:[%s1 + $0x154] sm:$0xf]
      %v434 = vld [vmem:[%s1 + $0x158] sm:$0xf]
      %v435 = vld [vmem:[%s1 + $0x15c] sm:$0xf]
      %v436 = vld [vmem:[%s1 + $0x160] sm:$0xf]
      %v437 = vld [vmem:[%s1 + $0x164] sm:$0xf]
      %v438 = vld [vmem:[%s1 + $0x168] sm:$0xf]
      %v439 = vld [vmem:[%s1 + $0x16c] sm:$0xf]
      %v440 = vld [vmem:[%s1 + $0x170] sm:$0xf]
      %v441 = vld [vmem:[%s1 + $0x174] sm:$0xf]
      %v442 = vld [vmem:[%s1 + $0x178] sm:$0xf]
      %v443 = vld [vmem:[%s1 + $0x17c] sm:$0xf]
      %v444 = vld [vmem:[%s1 + $0x180] sm:$0xf]
      %v445 = vld [vmem:[%s1 + $0x184] sm:$0xf]
      %v446 = vld [vmem:[%s1 + $0x188] sm:$0xf]
      %v447 = vld [vmem:[%s1 + $0x18c] sm:$0xf]
      %v448 = vld [vmem:[%s1 + $0x190] sm:$0xf]
      %v449 = vld [vmem:[%s1 + $0x194] sm:$0xf]
      %v450 = vld [vmem:[%s1 + $0x198] sm:$0xf]
      %v451 = vld [vmem:[%s1 + $0x19c] sm:$0xf]
      %v452 = vld [vmem:[%s1 + $0x1a0] sm:$0xf]
      %v453 = vld [vmem:[%s1 + $0x1a4] sm:$0xf]
      %v454 = vld [vmem:[%s1 + $0x1a8] sm:$0xf]
      %v455 = vld [vmem:[%s1 + $0x1ac] sm:$0xf]
      %v456 = vld [vmem:[%s1 + $0x1b0] sm:$0xf]
      %v457 = vld [vmem:[%s1 + $0x1b4] sm:$0xf]
      %v458 = vld [vmem:[%s1 + $0x1b8] sm:$0xf]
      %v459 = vld [vmem:[%s1 + $0x1bc] sm:$0xf]
      %v460 = vld [vmem:[%s1 + $0x1c0] sm:$0xf]
      %v461 = vld [vmem:[%s1 + $0x1c4] sm:$0xf]
      %v462 = vld [vmem:[%s1 + $0x1c8] sm:$0xf]
      %v463 = vld [vmem:[%s1 + $0x1cc] sm:$0xf]
      %v464 = vld [vmem:[%s1 + $0x1d0] sm:$0xf]
      %v465 = vld [vmem:[%s1 + $0x1d4] sm:$0xf]
      %v466 = vld [vmem:[%s1 + $0x1d8] sm:$0xf]
      %v467 = vld [vmem:[%s1 + $0x1dc] sm:$0xf]
      %v468 = vld [vmem:[%s1 + $0x1e0] sm:$0xf]
      %v469 = vld [vmem:[%s1 + $0x1e4] sm:$0xf]
      %v470 = vld [vmem:[%s1 + $0x1e8] sm:$0xf]
      %v471 = vld [vmem:[%s1 + $0x1ec] sm:$0xf]
      %v472 = vld [vmem:[%s1 + $0x1f0] sm:$0xf]
      %v473 = vld [vmem:[%s1 + $0x1f4] sm:$0xf]
      %v474 = vld [vmem:[%s1 + $0x1f8] sm:$0xf]
      %v475 = vld [vmem:[%s1 + $0x1fc] sm:$0xf]
      %v476 = vld [vmem:[%s1 + $0x200] sm:$0xf]
      %v477 = vld [vmem:[%s1 + $0x204] sm:$0xf]
      %v478 = vld [vmem:[%s1 + $0x208] sm:$0xf]
      %v479 = vld [vmem:[%s1 + $0x20c] sm:$0xf]
      %v480 = vld [vmem:[%s1 + $0x210] sm:$0xf]
      %v481 = vld [vmem:[%s1 + $0x214] sm:$0xf]
      %v482 = vld [vmem:[%s1 + $0x218] sm:$0xf]
      %v483 = vld [vmem:[%s1 + $0x21c] sm:$0xf]
      %v484 = vld [vmem:[%s1 + $0x220] sm:$0xf]
      %v485 = vld [vmem:[%s1 + $0x224] sm:$0xf]
      %v486 = vld [vmem:[%s1 + $0x228] sm:$0xf]
      %v487 = vld [vmem:[%s1 + $0x22c] sm:$0xf]
      %v488 = vld [vmem:[%s1 + $0x230] sm:$0xf]
      %v489 = vld [vmem:[%s1 + $0x234] sm:$0xf]
      %v490 = vld [vmem:[%s1 + $0x238] sm:$0xf]
      %v491 = vld [vmem:[%s1 + $0x23c] sm:$0xf]
      %v492 = vld [vmem:[%s1 + $0x240] sm:$0xf]
      %v493 = vld [vmem:[%s1 + $0x244] sm:$0xf]
      %v494 = vld [vmem:[%s1 + $0x248] sm:$0xf]
      %v495 = vld [vmem:[%s1 + $0x24c] sm:$0xf]
      %v496 = vld [vmem:[%s1 + $0x250] sm:$0xf]
      %v497 = vld [vmem:[%s1 + $0x254] sm:$0xf]
      %v498 = vld [vmem:[%s1 + $0x258] sm:$0xf]
      %v499 = vld [vmem:[%s1 + $0x25c] sm:$0xf]
      %v500 = vld [vmem:[%s1 + $0x260] sm:$0xf]
      %v501 = vld [vmem:[%s1 + $0x264] sm:$0xf]
      %v502 = vld [vmem:[%s1 + $0x268] sm:$0xf]
      %v503 = vld [vmem:[%s1 + $0x26c] sm:$0xf]
      %v504 = vld [vmem:[%s1 + $0x270] sm:$0xf]
      %v505 = vld [vmem:[%s1 + $0x274] sm:$0xf]
      %v506 = vld [vmem:[%s1 + $0x278] sm:$0xf]
      %v507 = vld [vmem:[%s1 + $0x27c] sm:$0xf]
      %v508 = vld [vmem:[%s1 + $0x280] sm:$0xf]
      %v509 = vld [vmem:[%s1 + $0x284] sm:$0xf]
      %v510 = vld [vmem:[%s1 + $0x288] sm:$0xf]
      %v511 = vld [vmem:[%s1 + $0x28c] sm:$0xf]
      %v512 = vld [vmem:[%s1 + $0x290] sm:$0xf]
      %v513 = vld [vmem:[%s1 + $0x294] sm:$0xf]
      %v514 = vld [vmem:[%s1 + $0x298] sm:$0xf]
      %v515 = vld [vmem:[%s1 + $0x29c] sm:$0xf]
      %v516 = vld [vmem:[%s1 + $0x2a0] sm:$0xf]
      %v517 = vld [vmem:[%s1 + $0x2a4] sm:$0xf]
      %v518 = vld [vmem:[%s1 + $0x2a8] sm:$0xf]
      %v519 = vld [vmem:[%s1 + $0x2ac] sm:$0xf]
      %v520 = vld [vmem:[%s1 + $0x2b0] sm:$0xf]
      %v521 = vld [vmem:[%s1 + $0x2b4] sm:$0xf]
      %v522 = vld [vmem:[%s1 + $0x2b8] sm:$0xf]
      %v523 = vld [vmem:[%s1 + $0x2bc] sm:$0xf]
      %v524 = vld [vmem:[%s1 + $0x2c0] sm:$0xf]
      %v525 = vld [vmem:[%s1 + $0x2c4] sm:$0xf]
      %v526 = vld [vmem:[%s1 + $0x2c8] sm:$0xf]
      %v527 = vld [vmem:[%s1 + $0x2cc] sm:$0xf]
      %v528 = vld [vmem:[%s1 + $0x2d0] sm:$0xf]
      %v529 = vld [vmem:[%s1 + $0x2d4] sm:$0xf]
      %v530 = vld [vmem:[%s1 + $0x2d8] sm:$0xf]
      %v531 = vld [vmem:[%s1 + $0x2dc] sm:$0xf]
      %v532 = vld [vmem:[%s1 + $0x2e0] sm:$0xf]
      %v533 = vld [vmem:[%s1 + $0x2e4] sm:$0xf]
      %v534 = vld [vmem:[%s1 + $0x2e8] sm:$0xf]
      %v535 = vld [vmem:[%s1 + $0x2ec] sm:$0xf]
      %v536 = vld [vmem:[%s1 + $0x2f0] sm:$0xf]
      %v537 = vld [vmem:[%s1 + $0x2f4] sm:$0xf]
      %v538 = vld [vmem:[%s1 + $0x2f8] sm:$0xf]
      %v539 = vld [vmem:[%s1 + $0x2fc] sm:$0xf]
      %v540 = vld [vmem:[%s1 + $0x300] sm:$0xf]
      %v541 = vld [vmem:[%s1 + $0x304] sm:$0xf]
      %v542 = vld [vmem:[%s1 + $0x308] sm:$0xf]
      %v543 = vld [vmem:[%s1 + $0x30c] sm:$0xf]
      %v544 = vld [vmem:[%s1 + $0x310] sm:$0xf]
      %v545 = vld [vmem:[%s1 + $0x314] sm:$0xf]
      %v546 = vld [vmem:[%s1 + $0x318] sm:$0xf]
      %v547 = vld [vmem:[%s1 + $0x31c] sm:$0xf]
      %v548 = vld [vmem:[%s1 + $0x320] sm:$0xf]
      %v549 = vld [vmem:[%s1 + $0x324] sm:$0xf]
      %v550 = vld [vmem:[%s1 + $0x328] sm:$0xf]
      %v551 = vld [vmem:[%s1 + $0x32c] sm:$0xf]
      %v552 = vld [vmem:[%s1 + $0x330] sm:$0xf]
      %v553 = vld [vmem:[%s1 + $0x334] sm:$0xf]
      %v554 = vld [vmem:[%s1 + $0x338] sm:$0xf]
      %v555 = vld [vmem:[%s1 + $0x33c] sm:$0xf]
      %v556 = vld [vmem:[%s1 + $0x340] sm:$0xf]
      %v557 = vld [vmem:[%s1 + $0x344] sm:$0xf]
      %v558 = vld [vmem:[%s1 + $0x348] sm:$0xf]
      %v559 = vld [vmem:[%s1 + $0x34c] sm:$0xf]
      %v560 = vld [vmem:[%s1 + $0x350] sm:$0xf]
      %v561 = vld [vmem:[%s1 + $0x354] sm:$0xf]
      %v562 = vld [vmem:[%s1 + $0x358] sm:$0xf]
      %v563 = vld [vmem:[%s1 + $0x35c] sm:$0xf]
      %v564 = vld [vmem:[%s1 + $0x360] sm:$0xf]
      %v565 = vld [vmem:[%s1 + $0x364] sm:$0xf]
      %v566 = vld [vmem:[%s1 + $0x368] sm:$0xf]
      %v567 = vld [vmem:[%s1 + $0x36c] sm:$0xf]
      %v568 = vld [vmem:[%s1 + $0x370] sm:$0xf]
      %v569 = vld [vmem:[%s1 + $0x374] sm:$0xf]
      %v570 = vld [vmem:[%s1 + $0x378] sm:$0xf]
      %v571 = vld [vmem:[%s1 + $0x37c] sm:$0xf]
      %v572 = vld [vmem:[%s1 + $0x380] sm:$0xf]
      %v573 = vld [vmem:[%s1 + $0x384] sm:$0xf]
      %v574 = vld [vmem:[%s1 + $0x388] sm:$0xf]
      %v575 = vld [vmem:[%s1 + $0x38c] sm:$0xf]
      %v576 = vld [vmem:[%s1 + $0x390] sm:$0xf]
      %v577 = vld [vmem:[%s1 + $0x394] sm:$0xf]
      %v578 = vld [vmem:[%s1 + $0x398] sm:$0xf]
      %v579 = vld [vmem:[%s1 + $0x39c] sm:$0xf]
      %v580 = vld [vmem:[%s1 + $0x3a0] sm:$0xf]
      %v581 = vld [vmem:[%s1 + $0x3a4] sm:$0xf]
      %v582 = vld [vmem:[%s1 + $0x3a8] sm:$0xf]
      %v583 = vld [vmem:[%s1 + $0x3ac] sm:$0xf]
      %v584 = vld [vmem:[%s1 + $0x3b0] sm:$0xf]
      %v585 = vld [vmem:[%s1 + $0x3b4] sm:$0xf]
      %v586 = vld [vmem:[%s1 + $0x3b8] sm:$0xf]
      %v587 = vld [vmem:[%s1 + $0x3bc] sm:$0xf]
      %v588 = vld [vmem:[%s1 + $0x3c0] sm:$0xf]
      %v589 = vld [vmem:[%s1 + $0x3c4] sm:$0xf]
      %v590 = vld [vmem:[%s1 + $0x3c8] sm:$0xf]
      %v591 = vld [vmem:[%s1 + $0x3cc] sm:$0xf]
      %v592 = vld [vmem:[%s1 + $0x3d0] sm:$0xf]
      %v593 = vld [vmem:[%s1 + $0x3d4] sm:$0xf]
      %v594 = vld [vmem:[%s1 + $0x3d8] sm:$0xf]
      %v595 = vld [vmem:[%s1 + $0x3dc] sm:$0xf]
      %v596 = vld [vmem:[%s1 + $0x3e0] sm:$0xf]
      %v597 = vld [vmem:[%s1 + $0x3e4] sm:$0xf]
      %v598 = vld [vmem:[%s1 + $0x3e8] sm:$0xf]
      %v599 = vld [vmem:[%s1 + $0x3ec] sm:$0xf]
      %v600 = vld [vmem:[%s1 + $0x3f0] sm:$0xf]
      %v601 = vld [vmem:[%s1 + $0x3f4] sm:$0xf]
      %v602 = vld [vmem:[%s1 + $0x3f8] sm:$0xf]
      %v603 = vld [vmem:[%s1 + $0x3fc] sm:$0xf]
      %v604 = vld [vmem:[%s2] sm:$0x1]
      %v606 = vlaneseq
      %v607 = vshrl.u32 %v606, 7
      %v608 = vsub.s32 0, %v607
      %v609 = vrot.slane %v604, %v608
      %v627 = vunpack.c.l.b16 %v332
      %v628 = vunpack.c.h.b16 %v332
      %v629 = vunpack.c.l.b16 %v333
      %v630 = vunpack.c.h.b16 %v333
      %v631 = vunpack.c.l.b16 %v334
      %v632 = vunpack.c.h.b16 %v334
      %v633 = vunpack.c.l.b16 %v335
      %v634 = vunpack.c.h.b16 %v335
      %v635 = vunpack.c.l.b16 %v336
      %v636 = vunpack.c.h.b16 %v336
      %v637 = vunpack.c.l.b16 %v337
      %v638 = vunpack.c.h.b16 %v337
      %v639 = vunpack.c.l.b16 %v338
      %v640 = vunpack.c.h.b16 %v338
      %v641 = vunpack.c.l.b16 %v339
      %v642 = vunpack.c.h.b16 %v339
      %v643 = vunpack.c.l.b16 %v340
      %v644 = vunpack.c.h.b16 %v340
      %v645 = vunpack.c.l.b16 %v341
      %v646 = vunpack.c.h.b16 %v341
      %v647 = vunpack.c.l.b16 %v342
      %v648 = vunpack.c.h.b16 %v342
      %v649 = vunpack.c.l.b16 %v343
      %v650 = vunpack.c.h.b16 %v343
      %v651 = vunpack.c.l.b16 %v344
      %v652 = vunpack.c.h.b16 %v344
      %v653 = vunpack.c.l.b16 %v345
      %v654 = vunpack.c.h.b16 %v345
      %v655 = vunpack.c.l.b16 %v346
      %v656 = vunpack.c.h.b16 %v346
      %v657 = vunpack.c.l.b16 %v347
      %v658 = vunpack.c.h.b16 %v347
      %v659 = vpack.c.b16 %v643, %v627
      %v660 = vpack.c.b16 %v644, %v628
      %v661 = vpack.c.b16 %v645, %v629
      %v662 = vpack.c.b16 %v646, %v630
      %v663 = vpack.c.b16 %v647, %v631
      %v664 = vpack.c.b16 %v648, %v632
      %v665 = vpack.c.b16 %v649, %v633
      %v666 = vpack.c.b16 %v650, %v634
      %v667 = vpack.c.b16 %v651, %v635
      %v668 = vpack.c.b16 %v652, %v636
      %v669 = vpack.c.b16 %v653, %v637
      %v670 = vpack.c.b16 %v654, %v638
      %v671 = vpack.c.b16 %v655, %v639
      %v672 = vpack.c.b16 %v656, %v640
      %v673 = vpack.c.b16 %v657, %v641
      %v674 = vpack.c.b16 %v658, %v642
      %v947 = vunpack.c.l.b16 %v348
      %v948 = vunpack.c.l.b16 %v349
      %v949 = vunpack.c.l.b16 %v350
      %v950 = vunpack.c.l.b16 %v351
      %v951 = vunpack.c.l.b16 %v352
      %v952 = vunpack.c.l.b16 %v353
      %v953 = vunpack.c.l.b16 %v354
      %v954 = vunpack.c.l.b16 %v355
      %v955 = vunpack.c.l.b16 %v356
      %v956 = vunpack.c.l.b16 %v357
      %v957 = vunpack.c.l.b16 %v358
      %v958 = vunpack.c.l.b16 %v359
      %v959 = vunpack.c.l.b16 %v360
      %v960 = vunpack.c.l.b16 %v361
      %v961 = vunpack.c.l.b16 %v362
      %v962 = vunpack.c.l.b16 %v363
      %v963 = vunpack.c.l.b16 %v364
      %v964 = vunpack.c.l.b16 %v365
      %v965 = vunpack.c.l.b16 %v366
      %v966 = vunpack.c.l.b16 %v367
      %v967 = vunpack.c.l.b16 %v368
      %v968 = vunpack.c.l.b16 %v369
      %v969 = vunpack.c.l.b16 %v370
      %v970 = vunpack.c.l.b16 %v371
      %v971 = vunpack.c.l.b16 %v372
      %v972 = vunpack.c.l.b16 %v373
      %v973 = vunpack.c.l.b16 %v374
      %v974 = vunpack.c.l.b16 %v375
      %v975 = vunpack.c.l.b16 %v376
      %v976 = vunpack.c.l.b16 %v377
      %v977 = vunpack.c.l.b16 %v378
      %v978 = vunpack.c.l.b16 %v379
      %v979 = vunpack.c.l.b16 %v380
      %v980 = vunpack.c.l.b16 %v381
      %v981 = vunpack.c.l.b16 %v382
      %v982 = vunpack.c.l.b16 %v383
      %v983 = vunpack.c.l.b16 %v384
      %v984 = vunpack.c.l.b16 %v385
      %v985 = vunpack.c.l.b16 %v386
      %v986 = vunpack.c.l.b16 %v387
      %v987 = vunpack.c.l.b16 %v388
      %v988 = vunpack.c.l.b16 %v389
      %v989 = vunpack.c.l.b16 %v390
      %v990 = vunpack.c.l.b16 %v391
      %v991 = vunpack.c.l.b16 %v392
      %v992 = vunpack.c.l.b16 %v393
      %v993 = vunpack.c.l.b16 %v394
      %v994 = vunpack.c.l.b16 %v395
      %v995 = vunpack.c.l.b16 %v396
      %v996 = vunpack.c.l.b16 %v397
      %v997 = vunpack.c.l.b16 %v398
      %v998 = vunpack.c.l.b16 %v399
      %v999 = vunpack.c.l.b16 %v400
      %v1000 = vunpack.c.l.b16 %v401
      %v1001 = vunpack.c.l.b16 %v402
      %v1002 = vunpack.c.l.b16 %v403
      %v1003 = vunpack.c.l.b16 %v404
      %v1004 = vunpack.c.l.b16 %v405
      %v1005 = vunpack.c.l.b16 %v406
      %v1006 = vunpack.c.l.b16 %v407
      %v1007 = vunpack.c.l.b16 %v408
      %v1008 = vunpack.c.l.b16 %v409
      %v1009 = vunpack.c.l.b16 %v410
      %v1010 = vunpack.c.l.b16 %v411
      %v1011 = vunpack.c.l.b16 %v412
      %v1012 = vunpack.c.l.b16 %v413
      %v1013 = vunpack.c.l.b16 %v414
      %v1014 = vunpack.c.l.b16 %v415
      %v1015 = vunpack.c.l.b16 %v416
      %v1016 = vunpack.c.l.b16 %v417
      %v1017 = vunpack.c.l.b16 %v418
      %v1018 = vunpack.c.l.b16 %v419
      %v1019 = vunpack.c.l.b16 %v420
      %v1020 = vunpack.c.l.b16 %v421
      %v1021 = vunpack.c.l.b16 %v422
      %v1022 = vunpack.c.l.b16 %v423
      %v1023 = vunpack.c.l.b16 %v424
      %v1024 = vunpack.c.l.b16 %v425
      %v1025 = vunpack.c.l.b16 %v426
      %v1026 = vunpack.c.l.b16 %v427
      %v1027 = vunpack.c.l.b16 %v428
      %v1028 = vunpack.c.l.b16 %v429
      %v1029 = vunpack.c.l.b16 %v430
      %v1030 = vunpack.c.l.b16 %v431
      %v1031 = vunpack.c.l.b16 %v432
      %v1032 = vunpack.c.l.b16 %v433
      %v1033 = vunpack.c.l.b16 %v434
      %v1034 = vunpack.c.l.b16 %v435
      %v1035 = vunpack.c.l.b16 %v436
      %v1036 = vunpack.c.l.b16 %v437
      %v1037 = vunpack.c.l.b16 %v438
      %v1038 = vunpack.c.l.b16 %v439
      %v1039 = vunpack.c.l.b16 %v440
      %v1040 = vunpack.c.l.b16 %v441
      %v1041 = vunpack.c.l.b16 %v442
      %v1042 = vunpack.c.l.b16 %v443
      %v1043 = vunpack.c.l.b16 %v444
      %v1044 = vunpack.c.l.b16 %v445
      %v1045 = vunpack.c.l.b16 %v446
      %v1046 = vunpack.c.l.b16 %v447
      %v1047 = vunpack.c.l.b16 %v448
      %v1048 = vunpack.c.l.b16 %v449
      %v1049 = vunpack.c.l.b16 %v450
      %v1050 = vunpack.c.l.b16 %v451
      %v1051 = vunpack.c.l.b16 %v452
      %v1052 = vunpack.c.l.b16 %v453
      %v1053 = vunpack.c.l.b16 %v454
      %v1054 = vunpack.c.l.b16 %v455
      %v1055 = vunpack.c.l.b16 %v456
      %v1056 = vunpack.c.l.b16 %v457
      %v1057 = vunpack.c.l.b16 %v458
      %v1058 = vunpack.c.l.b16 %v459
      %v1059 = vunpack.c.l.b16 %v460
      %v1060 = vunpack.c.l.b16 %v461
      %v1061 = vunpack.c.l.b16 %v462
      %v1062 = vunpack.c.l.b16 %v463
      %v1063 = vunpack.c.l.b16 %v464
      %v1064 = vunpack.c.l.b16 %v465
      %v1065 = vunpack.c.l.b16 %v466
      %v1066 = vunpack.c.l.b16 %v467
      %v1067 = vunpack.c.l.b16 %v468
      %v1068 = vunpack.c.l.b16 %v469
      %v1069 = vunpack.c.l.b16 %v470
      %v1070 = vunpack.c.l.b16 %v471
      %v1071 = vunpack.c.l.b16 %v472
      %v1072 = vunpack.c.l.b16 %v473
      %v1073 = vunpack.c.l.b16 %v474
      %v1074 = vunpack.c.l.b16 %v475
      %v1075 = vunpack.c.l.b16 %v476
      %v1076 = vunpack.c.l.b16 %v477
      %v1077 = vunpack.c.l.b16 %v478
      %v1078 = vunpack.c.l.b16 %v479
      %v1079 = vunpack.c.l.b16 %v480
      %v1080 = vunpack.c.l.b16 %v481
      %v1081 = vunpack.c.l.b16 %v482
      %v1082 = vunpack.c.l.b16 %v483
      %v1083 = vunpack.c.l.b16 %v484
      %v1084 = vunpack.c.l.b16 %v485
      %v1085 = vunpack.c.l.b16 %v486
      %v1086 = vunpack.c.l.b16 %v487
      %v1087 = vunpack.c.l.b16 %v488
      %v1088 = vunpack.c.l.b16 %v489
      %v1089 = vunpack.c.l.b16 %v490
      %v1090 = vunpack.c.l.b16 %v491
      %v1091 = vunpack.c.l.b16 %v492
      %v1092 = vunpack.c.l.b16 %v493
      %v1093 = vunpack.c.l.b16 %v494
      %v1094 = vunpack.c.l.b16 %v495
      %v1095 = vunpack.c.l.b16 %v496
      %v1096 = vunpack.c.l.b16 %v497
      %v1097 = vunpack.c.l.b16 %v498
      %v1098 = vunpack.c.l.b16 %v499
      %v1099 = vunpack.c.l.b16 %v500
      %v1100 = vunpack.c.l.b16 %v501
      %v1101 = vunpack.c.l.b16 %v502
      %v1102 = vunpack.c.l.b16 %v503
      %v1103 = vunpack.c.l.b16 %v504
      %v1104 = vunpack.c.l.b16 %v505
      %v1105 = vunpack.c.l.b16 %v506
      %v1106 = vunpack.c.l.b16 %v507
      %v1107 = vunpack.c.l.b16 %v508
      %v1108 = vunpack.c.l.b16 %v509
      %v1109 = vunpack.c.l.b16 %v510
      %v1110 = vunpack.c.l.b16 %v511
      %v1111 = vunpack.c.l.b16 %v512
      %v1112 = vunpack.c.l.b16 %v513
      %v1113 = vunpack.c.l.b16 %v514
      %v1114 = vunpack.c.l.b16 %v515
      %v1115 = vunpack.c.l.b16 %v516
      %v1116 = vunpack.c.l.b16 %v517
      %v1117 = vunpack.c.l.b16 %v518
      %v1118 = vunpack.c.l.b16 %v519
      %v1119 = vunpack.c.l.b16 %v520
      %v1120 = vunpack.c.l.b16 %v521
      %v1121 = vunpack.c.l.b16 %v522
      %v1122 = vunpack.c.l.b16 %v523
      %v1123 = vunpack.c.l.b16 %v524
      %v1124 = vunpack.c.l.b16 %v525
      %v1125 = vunpack.c.l.b16 %v526
      %v1126 = vunpack.c.l.b16 %v527
      %v1127 = vunpack.c.l.b16 %v528
      %v1128 = vunpack.c.l.b16 %v529
      %v1129 = vunpack.c.l.b16 %v530
      %v1130 = vunpack.c.l.b16 %v531
      %v1131 = vunpack.c.l.b16 %v532
      %v1132 = vunpack.c.l.b16 %v533
      %v1133 = vunpack.c.l.b16 %v534
      %v1134 = vunpack.c.l.b16 %v535
      %v1135 = vunpack.c.l.b16 %v536
      %v1136 = vunpack.c.l.b16 %v537
      %v1137 = vunpack.c.l.b16 %v538
      %v1138 = vunpack.c.l.b16 %v539
      %v1139 = vunpack.c.l.b16 %v540
      %v1140 = vunpack.c.l.b16 %v541
      %v1141 = vunpack.c.l.b16 %v542
      %v1142 = vunpack.c.l.b16 %v543
      %v1143 = vunpack.c.l.b16 %v544
      %v1144 = vunpack.c.l.b16 %v545
      %v1145 = vunpack.c.l.b16 %v546
      %v1146 = vunpack.c.l.b16 %v547
      %v1147 = vunpack.c.l.b16 %v548
      %v1148 = vunpack.c.l.b16 %v549
      %v1149 = vunpack.c.l.b16 %v550
      %v1150 = vunpack.c.l.b16 %v551
      %v1151 = vunpack.c.l.b16 %v552
      %v1152 = vunpack.c.l.b16 %v553
      %v1153 = vunpack.c.l.b16 %v554
      %v1154 = vunpack.c.l.b16 %v555
      %v1155 = vunpack.c.l.b16 %v556
      %v1156 = vunpack.c.l.b16 %v557
      %v1157 = vunpack.c.l.b16 %v558
      %v1158 = vunpack.c.l.b16 %v559
      %v1159 = vunpack.c.l.b16 %v560
      %v1160 = vunpack.c.l.b16 %v561
      %v1161 = vunpack.c.l.b16 %v562
      %v1162 = vunpack.c.l.b16 %v563
      %v1163 = vunpack.c.l.b16 %v564
      %v1164 = vunpack.c.l.b16 %v565
      %v1165 = vunpack.c.l.b16 %v566
      %v1166 = vunpack.c.l.b16 %v567
      %v1167 = vunpack.c.l.b16 %v568
      %v1168 = vunpack.c.l.b16 %v569
      %v1169 = vunpack.c.l.b16 %v570
      %v1170 = vunpack.c.l.b16 %v571
      %v1171 = vunpack.c.l.b16 %v572
      %v1172 = vunpack.c.l.b16 %v573
      %v1173 = vunpack.c.l.b16 %v574
      %v1174 = vunpack.c.l.b16 %v575
      %v1175 = vunpack.c.l.b16 %v576
      %v1176 = vunpack.c.l.b16 %v577
      %v1177 = vunpack.c.l.b16 %v578
      %v1178 = vunpack.c.l.b16 %v579
      %v1179 = vunpack.c.l.b16 %v580
      %v1180 = vunpack.c.l.b16 %v581
      %v1181 = vunpack.c.l.b16 %v582
      %v1182 = vunpack.c.l.b16 %v583
      %v1183 = vunpack.c.l.b16 %v584
      %v1184 = vunpack.c.l.b16 %v585
      %v1185 = vunpack.c.l.b16 %v586
      %v1186 = vunpack.c.l.b16 %v587
      %v1187 = vunpack.c.l.b16 %v588
      %v1188 = vunpack.c.l.b16 %v589
      %v1189 = vunpack.c.l.b16 %v590
      %v1190 = vunpack.c.l.b16 %v591
      %v1191 = vunpack.c.l.b16 %v592
      %v1192 = vunpack.c.l.b16 %v593
      %v1193 = vunpack.c.l.b16 %v594
      %v1194 = vunpack.c.l.b16 %v595
      %v1195 = vunpack.c.l.b16 %v596
      %v1196 = vunpack.c.l.b16 %v597
      %v1197 = vunpack.c.l.b16 %v598
      %v1198 = vunpack.c.l.b16 %v599
      %v1199 = vunpack.c.l.b16 %v600
      %v1200 = vunpack.c.l.b16 %v601
      %v1201 = vunpack.c.l.b16 %v602
      %v1202 = vunpack.c.l.b16 %v603
      %v1203 = vpack.c.b16 %v948, %v947
      %v1204 = vpack.c.b16 %v950, %v949
      %v1205 = vpack.c.b16 %v952, %v951
      %v1206 = vpack.c.b16 %v954, %v953
      %v1207 = vpack.c.b16 %v956, %v955
      %v1208 = vpack.c.b16 %v958, %v957
      %v1209 = vpack.c.b16 %v960, %v959
      %v1210 = vpack.c.b16 %v962, %v961
      %v1211 = vpack.c.b16 %v964, %v963
      %v1212 = vpack.c.b16 %v966, %v965
      %v1213 = vpack.c.b16 %v968, %v967
      %v1214 = vpack.c.b16 %v970, %v969
      %v1215 = vpack.c.b16 %v972, %v971
      %v1216 = vpack.c.b16 %v974, %v973
      %v1217 = vpack.c.b16 %v976, %v975
      %v1218 = vpack.c.b16 %v978, %v977
      %v1219 = vpack.c.b16 %v980, %v979
      %v1220 = vpack.c.b16 %v982, %v981
      %v1221 = vpack.c.b16 %v984, %v983
      %v1222 = vpack.c.b16 %v986, %v985
      %v1223 = vpack.c.b16 %v988, %v987
      %v1224 = vpack.c.b16 %v990, %v989
      %v1225 = vpack.c.b16 %v992, %v991
      %v1226 = vpack.c.b16 %v994, %v993
      %v1227 = vpack.c.b16 %v996, %v995
      %v1228 = vpack.c.b16 %v998, %v997
      %v1229 = vpack.c.b16 %v1000, %v999
      %v1230 = vpack.c.b16 %v1002, %v1001
      %v1231 = vpack.c.b16 %v1004, %v1003
      %v1232 = vpack.c.b16 %v1006, %v1005
      %v1233 = vpack.c.b16 %v1008, %v1007
      %v1234 = vpack.c.b16 %v1010, %v1009
      %v1235 = vpack.c.b16 %v1012, %v1011
      %v1236 = vpack.c.b16 %v1014, %v1013
      %v1237 = vpack.c.b16 %v1016, %v1015
      %v1238 = vpack.c.b16 %v1018, %v1017
      %v1239 = vpack.c.b16 %v1020, %v1019
      %v1240 = vpack.c.b16 %v1022, %v1021
      %v1241 = vpack.c.b16 %v1024, %v1023
      %v1242 = vpack.c.b16 %v1026, %v1025
      %v1243 = vpack.c.b16 %v1028, %v1027
      %v1244 = vpack.c.b16 %v1030, %v1029
      %v1245 = vpack.c.b16 %v1032, %v1031
      %v1246 = vpack.c.b16 %v1034, %v1033
      %v1247 = vpack.c.b16 %v1036, %v1035
      %v1248 = vpack.c.b16 %v1038, %v1037
      %v1249 = vpack.c.b16 %v1040, %v1039
      %v1250 = vpack.c.b16 %v1042, %v1041
      %v1251 = vpack.c.b16 %v1044, %v1043
      %v1252 = vpack.c.b16 %v1046, %v1045
      %v1253 = vpack.c.b16 %v1048, %v1047
      %v1254 = vpack.c.b16 %v1050, %v1049
      %v1255 = vpack.c.b16 %v1052, %v1051
      %v1256 = vpack.c.b16 %v1054, %v1053
      %v1257 = vpack.c.b16 %v1056, %v1055
      %v1258 = vpack.c.b16 %v1058, %v1057
      %v1259 = vpack.c.b16 %v1060, %v1059
      %v1260 = vpack.c.b16 %v1062, %v1061
      %v1261 = vpack.c.b16 %v1064, %v1063
      %v1262 = vpack.c.b16 %v1066, %v1065
      %v1263 = vpack.c.b16 %v1068, %v1067
      %v1264 = vpack.c.b16 %v1070, %v1069
      %v1265 = vpack.c.b16 %v1072, %v1071
      %v1266 = vpack.c.b16 %v1074, %v1073
      %v1267 = vpack.c.b16 %v1076, %v1075
      %v1268 = vpack.c.b16 %v1078, %v1077
      %v1269 = vpack.c.b16 %v1080, %v1079
      %v1270 = vpack.c.b16 %v1082, %v1081
      %v1271 = vpack.c.b16 %v1084, %v1083
      %v1272 = vpack.c.b16 %v1086, %v1085
      %v1273 = vpack.c.b16 %v1088, %v1087
      %v1274 = vpack.c.b16 %v1090, %v1089
      %v1275 = vpack.c.b16 %v1092, %v1091
      %v1276 = vpack.c.b16 %v1094, %v1093
      %v1277 = vpack.c.b16 %v1096, %v1095
      %v1278 = vpack.c.b16 %v1098, %v1097
      %v1279 = vpack.c.b16 %v1100, %v1099
      %v1280 = vpack.c.b16 %v1102, %v1101
      %v1281 = vpack.c.b16 %v1104, %v1103
      %v1282 = vpack.c.b16 %v1106, %v1105
      %v1283 = vpack.c.b16 %v1108, %v1107
      %v1284 = vpack.c.b16 %v1110, %v1109
      %v1285 = vpack.c.b16 %v1112, %v1111
      %v1286 = vpack.c.b16 %v1114, %v1113
      %v1287 = vpack.c.b16 %v1116, %v1115
      %v1288 = vpack.c.b16 %v1118, %v1117
      %v1289 = vpack.c.b16 %v1120, %v1119
      %v1290 = vpack.c.b16 %v1122, %v1121
      %v1291 = vpack.c.b16 %v1124, %v1123
      %v1292 = vpack.c.b16 %v1126, %v1125
      %v1293 = vpack.c.b16 %v1128, %v1127
      %v1294 = vpack.c.b16 %v1130, %v1129
      %v1295 = vpack.c.b16 %v1132, %v1131
      %v1296 = vpack.c.b16 %v1134, %v1133
      %v1297 = vpack.c.b16 %v1136, %v1135
      %v1298 = vpack.c.b16 %v1138, %v1137
      %v1299 = vpack.c.b16 %v1140, %v1139
      %v1300 = vpack.c.b16 %v1142, %v1141
      %v1301 = vpack.c.b16 %v1144, %v1143
      %v1302 = vpack.c.b16 %v1146, %v1145
      %v1303 = vpack.c.b16 %v1148, %v1147
      %v1304 = vpack.c.b16 %v1150, %v1149
      %v1305 = vpack.c.b16 %v1152, %v1151
      %v1306 = vpack.c.b16 %v1154, %v1153
      %v1307 = vpack.c.b16 %v1156, %v1155
      %v1308 = vpack.c.b16 %v1158, %v1157
      %v1309 = vpack.c.b16 %v1160, %v1159
      %v1310 = vpack.c.b16 %v1162, %v1161
      %v1311 = vpack.c.b16 %v1164, %v1163
      %v1312 = vpack.c.b16 %v1166, %v1165
      %v1313 = vpack.c.b16 %v1168, %v1167
      %v1314 = vpack.c.b16 %v1170, %v1169
      %v1315 = vpack.c.b16 %v1172, %v1171
      %v1316 = vpack.c.b16 %v1174, %v1173
      %v1317 = vpack.c.b16 %v1176, %v1175
      %v1318 = vpack.c.b16 %v1178, %v1177
      %v1319 = vpack.c.b16 %v1180, %v1179
      %v1320 = vpack.c.b16 %v1182, %v1181
      %v1321 = vpack.c.b16 %v1184, %v1183
      %v1322 = vpack.c.b16 %v1186, %v1185
      %v1323 = vpack.c.b16 %v1188, %v1187
      %v1324 = vpack.c.b16 %v1190, %v1189
      %v1325 = vpack.c.b16 %v1192, %v1191
      %v1326 = vpack.c.b16 %v1194, %v1193
      %v1327 = vpack.c.b16 %v1196, %v1195
      %v1328 = vpack.c.b16 %v1198, %v1197
      %v1329 = vpack.c.b16 %v1200, %v1199
      %v1330 = vpack.c.b16 %v1202, %v1201
      %1459 = vmatprep.subr.bf16.mxu0 0
      %1460 = vmatpush1.bf16.msra.mxu0 %v1203
      %1461 = vmatprep.subr.bf16.mxu0 0
      %1462 = vmatpush1.bf16.msra.mxu0 %v1204
      %1463 = vmatprep.subr.bf16.mxu0 0
      %1464 = vmatpush1.bf16.msra.mxu0 %v1205
      %1465 = vmatprep.subr.bf16.mxu0 0
      %1466 = vmatpush1.bf16.msra.mxu0 %v1206
      %1467 = vmatprep.subr.bf16.mxu0 0
      %1468 = vmatpush1.bf16.msra.mxu0 %v1207
      %1469 = vmatprep.subr.bf16.mxu0 0
      %1470 = vmatpush1.bf16.msra.mxu0 %v1208
      %1471 = vmatprep.subr.bf16.mxu0 0
      %1472 = vmatpush1.bf16.msra.mxu0 %v1209
      %1473 = vmatprep.subr.bf16.mxu0 0
      %1474 = vmatpush1.bf16.msra.mxu0 %v1210
      %1475 = vmatprep.subr.bf16.mxu0 0
      %1476 = vmatpush1.bf16.msra.mxu0 %v1211
      %1477 = vmatprep.subr.bf16.mxu0 0
      %1478 = vmatpush1.bf16.msra.mxu0 %v1212
      %1479 = vmatprep.subr.bf16.mxu0 0
      %1480 = vmatpush1.bf16.msra.mxu0 %v1213
      %1481 = vmatprep.subr.bf16.mxu0 0
      %1482 = vmatpush1.bf16.msra.mxu0 %v1214
      %1483 = vmatprep.subr.bf16.mxu0 0
      %1484 = vmatpush1.bf16.msra.mxu0 %v1215
      %1485 = vmatprep.subr.bf16.mxu0 0
      %1486 = vmatpush1.bf16.msra.mxu0 %v1216
      %1487 = vmatprep.subr.bf16.mxu0 0
      %1488 = vmatpush1.bf16.msra.mxu0 %v1217
      %1489 = vmatprep.subr.bf16.mxu0 0
      %1490 = vmatpush1.bf16.msra.mxu0 %v1218
      %1491 = vmatprep.mubr.bf16.mxu0 %v660
      %1492 = vmatmul.mubr.bf16.gmra.mrb[0].mxu0 %v659
      %v1493 = vpop.f32.mrb[0].mxu0
      %v1494 = vadd.f32 %v609, %v1493
      %v1495 = vpop.f32.mrb[0].mxu0
      %v1496 = vpop.f32.mrb[0].mxu0
      %v1497 = vadd.f32 %v609, %v1496
      %v1498 = vpop.f32.mrb[0].mxu0
      %1499 = vdwg.mxu0
      %1500 = vmatprep.subr.bf16.mxu0 0
      %1501 = vmatpush1.bf16.msra.mxu0 %v1219
      %1502 = vmatprep.subr.bf16.mxu0 0
      %1503 = vmatpush1.bf16.msra.mxu0 %v1220
      %1504 = vmatprep.subr.bf16.mxu0 0
      %1505 = vmatpush1.bf16.msra.mxu0 %v1221
      %1506 = vmatprep.subr.bf16.mxu0 0
      %1507 = vmatpush1.bf16.msra.mxu0 %v1222
      %1508 = vmatprep.subr.bf16.mxu0 0
      %1509 = vmatpush1.bf16.msra.mxu0 %v1223
      %1510 = vmatprep.subr.bf16.mxu0 0
      %1511 = vmatpush1.bf16.msra.mxu0 %v1224
      %1512 = vmatprep.subr.bf16.mxu0 0
      %1513 = vmatpush1.bf16.msra.mxu0 %v1225
      %1514 = vmatprep.subr.bf16.mxu0 0
      %1515 = vmatpush1.bf16.msra.mxu0 %v1226
      %1516 = vmatprep.subr.bf16.mxu0 0
      %1517 = vmatpush1.bf16.msra.mxu0 %v1227
      %1518 = vmatprep.subr.bf16.mxu0 0
      %1519 = vmatpush1.bf16.msra.mxu0 %v1228
      %1520 = vmatprep.subr.bf16.mxu0 0
      %1521 = vmatpush1.bf16.msra.mxu0 %v1229
      %1522 = vmatprep.subr.bf16.mxu0 0
      %1523 = vmatpush1.bf16.msra.mxu0 %v1230
      %1524 = vmatprep.subr.bf16.mxu0 0
      %1525 = vmatpush1.bf16.msra.mxu0 %v1231
      %1526 = vmatprep.subr.bf16.mxu0 0
      %1527 = vmatpush1.bf16.msra.mxu0 %v1232
      %1528 = vmatprep.subr.bf16.mxu0 0
      %1529 = vmatpush1.bf16.msra.mxu0 %v1233
      %1530 = vmatprep.subr.bf16.mxu0 0
      %1531 = vmatpush1.bf16.msra.mxu0 %v1234
      %1532 = vmatprep.mubr.bf16.mxu0 %v662
      %1533 = vmatmul.mubr.bf16.gmra.mrb[0].mxu0 %v661
      %v1534 = vpop.f32.mrb[0].mxu0
      %v1535 = vadd.f32 %v1494, %v1534
      %v1536 = vpop.f32.mrb[0].mxu0
      %v1537 = vpop.f32.mrb[0].mxu0
      %v1538 = vadd.f32 %v1497, %v1537
      %v1539 = vpop.f32.mrb[0].mxu0
      %1540 = vdwg.mxu0
      %1541 = vmatprep.subr.bf16.mxu0 0
      %1542 = vmatpush1.bf16.msra.mxu0 %v1235
      %1543 = vmatprep.subr.bf16.mxu0 0
      %1544 = vmatpush1.bf16.msra.mxu0 %v1236
      %1545 = vmatprep.subr.bf16.mxu0 0
      %1546 = vmatpush1.bf16.msra.mxu0 %v1237
      %1547 = vmatprep.subr.bf16.mxu0 0
      %1548 = vmatpush1.bf16.msra.mxu0 %v1238
      %1549 = vmatprep.subr.bf16.mxu0 0
      %1550 = vmatpush1.bf16.msra.mxu0 %v1239
      %1551 = vmatprep.subr.bf16.mxu0 0
      %1552 = vmatpush1.bf16.msra.mxu0 %v1240
      %1553 = vmatprep.subr.bf16.mxu0 0
      %1554 = vmatpush1.bf16.msra.mxu0 %v1241
      %1555 = vmatprep.subr.bf16.mxu0 0
      %1556 = vmatpush1.bf16.msra.mxu0 %v1242
      %1557 = vmatprep.subr.bf16.mxu0 0
      %1558 = vmatpush1.bf16.msra.mxu0 %v1243
      %1559 = vmatprep.subr.bf16.mxu0 0
      %1560 = vmatpush1.bf16.msra.mxu0 %v1244
      %1561 = vmatprep.subr.bf16.mxu0 0
      %1562 = vmatpush1.bf16.msra.mxu0 %v1245
      %1563 = vmatprep.subr.bf16.mxu0 0
      %1564 = vmatpush1.bf16.msra.mxu0 %v1246
      %1565 = vmatprep.subr.bf16.mxu0 0
      %1566 = vmatpush1.bf16.msra.mxu0 %v1247
      %1567 = vmatprep.subr.bf16.mxu0 0
      %1568 = vmatpush1.bf16.msra.mxu0 %v1248
      %1569 = vmatprep.subr.bf16.mxu0 0
      %1570 = vmatpush1.bf16.msra.mxu0 %v1249
      %1571 = vmatprep.subr.bf16.mxu0 0
      %1572 = vmatpush1.bf16.msra.mxu0 %v1250
      %1573 = vmatprep.mubr.bf16.mxu0 %v664
      %1574 = vmatmul.mubr.bf16.gmra.mrb[0].mxu0 %v663
      %v1575 = vpop.f32.mrb[0].mxu0
      %v1576 = vadd.f32 %v1535, %v1575
      %v1577 = vpop.f32.mrb[0].mxu0
      %v1578 = vpop.f32.mrb[0].mxu0
      %v1579 = vadd.f32 %v1538, %v1578
      %v1580 = vpop.f32.mrb[0].mxu0
      %1581 = vdwg.mxu0
      %1582 = vmatprep.subr.bf16.mxu0 0
      %1583 = vmatpush1.bf16.msra.mxu0 %v1251
      %1584 = vmatprep.subr.bf16.mxu0 0
      %1585 = vmatpush1.bf16.msra.mxu0 %v1252
      %1586 = vmatprep.subr.bf16.mxu0 0
      %1587 = vmatpush1.bf16.msra.mxu0 %v1253
      %1588 = vmatprep.subr.bf16.mxu0 0
      %1589 = vmatpush1.bf16.msra.mxu0 %v1254
      %1590 = vmatprep.subr.bf16.mxu0 0
      %1591 = vmatpush1.bf16.msra.mxu0 %v1255
      %1592 = vmatprep.subr.bf16.mxu0 0
      %1593 = vmatpush1.bf16.msra.mxu0 %v1256
      %1594 = vmatprep.subr.bf16.mxu0 0
      %1595 = vmatpush1.bf16.msra.mxu0 %v1257
      %1596 = vmatprep.subr.bf16.mxu0 0
      %1597 = vmatpush1.bf16.msra.mxu0 %v1258
      %1598 = vmatprep.subr.bf16.mxu0 0
      %1599 = vmatpush1.bf16.msra.mxu0 %v1259
      %1600 = vmatprep.subr.bf16.mxu0 0
      %1601 = vmatpush1.bf16.msra.mxu0 %v1260
      %1602 = vmatprep.subr.bf16.mxu0 0
      %1603 = vmatpush1.bf16.msra.mxu0 %v1261
      %1604 = vmatprep.subr.bf16.mxu0 0
      %1605 = vmatpush1.bf16.msra.mxu0 %v1262
      %1606 = vmatprep.subr.bf16.mxu0 0
      %1607 = vmatpush1.bf16.msra.mxu0 %v1263
      %1608 = vmatprep.subr.bf16.mxu0 0
      %1609 = vmatpush1.bf16.msra.mxu0 %v1264
      %1610 = vmatprep.subr.bf16.mxu0 0
      %1611 = vmatpush1.bf16.msra.mxu0 %v1265
      %1612 = vmatprep.subr.bf16.mxu0 0
      %1613 = vmatpush1.bf16.msra.mxu0 %v1266
      %1614 = vmatprep.mubr.bf16.mxu0 %v666
      %1615 = vmatmul.mubr.bf16.gmra.mrb[0].mxu0 %v665
      %v1616 = vpop.f32.mrb[0].mxu0
      %v1617 = vadd.f32 %v1576, %v1616
      %v1618 = vpop.f32.mrb[0].mxu0
      %v1619 = vpop.f32.mrb[0].mxu0
      %v1620 = vadd.f32 %v1579, %v1619
      %v1621 = vpop.f32.mrb[0].mxu0
      %1622 = vdwg.mxu0
      %1623 = vmatprep.subr.bf16.mxu0 0
      %1624 = vmatpush1.bf16.msra.mxu0 %v1267
      %1625 = vmatprep.subr.bf16.mxu0 0
      %1626 = vmatpush1.bf16.msra.mxu0 %v1268
      %1627 = vmatprep.subr.bf16.mxu0 0
      %1628 = vmatpush1.bf16.msra.mxu0 %v1269
      %1629 = vmatprep.subr.bf16.mxu0 0
      %1630 = vmatpush1.bf16.msra.mxu0 %v1270
      %1631 = vmatprep.subr.bf16.mxu0 0
      %1632 = vmatpush1.bf16.msra.mxu0 %v1271
      %1633 = vmatprep.subr.bf16.mxu0 0
      %1634 = vmatpush1.bf16.msra.mxu0 %v1272
      %1635 = vmatprep.subr.bf16.mxu0 0
      %1636 = vmatpush1.bf16.msra.mxu0 %v1273
      %1637 = vmatprep.subr.bf16.mxu0 0
      %1638 = vmatpush1.bf16.msra.mxu0 %v1274
      %1639 = vmatprep.subr.bf16.mxu0 0
      %1640 = vmatpush1.bf16.msra.mxu0 %v1275
      %1641 = vmatprep.subr.bf16.mxu0 0
      %1642 = vmatpush1.bf16.msra.mxu0 %v1276
      %1643 = vmatprep.subr.bf16.mxu0 0
      %1644 = vmatpush1.bf16.msra.mxu0 %v1277
      %1645 = vmatprep.subr.bf16.mxu0 0
      %1646 = vmatpush1.bf16.msra.mxu0 %v1278
      %1647 = vmatprep.subr.bf16.mxu0 0
      %1648 = vmatpush1.bf16.msra.mxu0 %v1279
      %1649 = vmatprep.subr.bf16.mxu0 0
      %1650 = vmatpush1.bf16.msra.mxu0 %v1280
      %1651 = vmatprep.subr.bf16.mxu0 0
      %1652 = vmatpush1.bf16.msra.mxu0 %v1281
      %1653 = vmatprep.subr.bf16.mxu0 0
      %1654 = vmatpush1.bf16.msra.mxu0 %v1282
      %1655 = vmatprep.mubr.bf16.mxu0 %v668
      %1656 = vmatmul.mubr.bf16.gmra.mrb[0].mxu0 %v667
      %v1657 = vpop.f32.mrb[0].mxu0
      %v1658 = vadd.f32 %v1617, %v1657
      %v1659 = vpop.f32.mrb[0].mxu0
      %v1660 = vpop.f32.mrb[0].mxu0
      %v1661 = vadd.f32 %v1620, %v1660
      %v1662 = vpop.f32.mrb[0].mxu0
      %1663 = vdwg.mxu0
      %1664 = vmatprep.subr.bf16.mxu0 0
      %1665 = vmatpush1.bf16.msra.mxu0 %v1283
      %1666 = vmatprep.subr.bf16.mxu0 0
      %1667 = vmatpush1.bf16.msra.mxu0 %v1284
      %1668 = vmatprep.subr.bf16.mxu0 0
      %1669 = vmatpush1.bf16.msra.mxu0 %v1285
      %1670 = vmatprep.subr.bf16.mxu0 0
      %1671 = vmatpush1.bf16.msra.mxu0 %v1286
      %1672 = vmatprep.subr.bf16.mxu0 0
      %1673 = vmatpush1.bf16.msra.mxu0 %v1287
      %1674 = vmatprep.subr.bf16.mxu0 0
      %1675 = vmatpush1.bf16.msra.mxu0 %v1288
      %1676 = vmatprep.subr.bf16.mxu0 0
      %1677 = vmatpush1.bf16.msra.mxu0 %v1289
      %1678 = vmatprep.subr.bf16.mxu0 0
      %1679 = vmatpush1.bf16.msra.mxu0 %v1290
      %1680 = vmatprep.subr.bf16.mxu0 0
      %1681 = vmatpush1.bf16.msra.mxu0 %v1291
      %1682 = vmatprep.subr.bf16.mxu0 0
      %1683 = vmatpush1.bf16.msra.mxu0 %v1292
      %1684 = vmatprep.subr.bf16.mxu0 0
      %1685 = vmatpush1.bf16.msra.mxu0 %v1293
      %1686 = vmatprep.subr.bf16.mxu0 0
      %1687 = vmatpush1.bf16.msra.mxu0 %v1294
      %1688 = vmatprep.subr.bf16.mxu0 0
      %1689 = vmatpush1.bf16.msra.mxu0 %v1295
      %1690 = vmatprep.subr.bf16.mxu0 0
      %1691 = vmatpush1.bf16.msra.mxu0 %v1296
      %1692 = vmatprep.subr.bf16.mxu0 0
      %1693 = vmatpush1.bf16.msra.mxu0 %v1297
      %1694 = vmatprep.subr.bf16.mxu0 0
      %1695 = vmatpush1.bf16.msra.mxu0 %v1298
      %1696 = vmatprep.mubr.bf16.mxu0 %v670
      %1697 = vmatmul.mubr.bf16.gmra.mrb[0].mxu0 %v669
      %v1698 = vpop.f32.mrb[0].mxu0
      %v1699 = vadd.f32 %v1658, %v1698
      %v1700 = vpop.f32.mrb[0].mxu0
      %v1701 = vpop.f32.mrb[0].mxu0
      %v1702 = vadd.f32 %v1661, %v1701
      %v1703 = vpop.f32.mrb[0].mxu0
      %1704 = vdwg.mxu0
      %1705 = vmatprep.subr.bf16.mxu0 0
      %1706 = vmatpush1.bf16.msra.mxu0 %v1299
      %1707 = vmatprep.subr.bf16.mxu0 0
      %1708 = vmatpush1.bf16.msra.mxu0 %v1300
      %1709 = vmatprep.subr.bf16.mxu0 0
      %1710 = vmatpush1.bf16.msra.mxu0 %v1301
      %1711 = vmatprep.subr.bf16.mxu0 0
      %1712 = vmatpush1.bf16.msra.mxu0 %v1302
      %1713 = vmatprep.subr.bf16.mxu0 0
      %1714 = vmatpush1.bf16.msra.mxu0 %v1303
      %1715 = vmatprep.subr.bf16.mxu0 0
      %1716 = vmatpush1.bf16.msra.mxu0 %v1304
      %1717 = vmatprep.subr.bf16.mxu0 0
      %1718 = vmatpush1.bf16.msra.mxu0 %v1305
      %1719 = vmatprep.subr.bf16.mxu0 0
      %1720 = vmatpush1.bf16.msra.mxu0 %v1306
      %1721 = vmatprep.subr.bf16.mxu0 0
      %1722 = vmatpush1.bf16.msra.mxu0 %v1307
      %1723 = vmatprep.subr.bf16.mxu0 0
      %1724 = vmatpush1.bf16.msra.mxu0 %v1308
      %1725 = vmatprep.subr.bf16.mxu0 0
      %1726 = vmatpush1.bf16.msra.mxu0 %v1309
      %1727 = vmatprep.subr.bf16.mxu0 0
      %1728 = vmatpush1.bf16.msra.mxu0 %v1310
      %1729 = vmatprep.subr.bf16.mxu0 0
      %1730 = vmatpush1.bf16.msra.mxu0 %v1311
      %1731 = vmatprep.subr.bf16.mxu0 0
      %1732 = vmatpush1.bf16.msra.mxu0 %v1312
      %1733 = vmatprep.subr.bf16.mxu0 0
      %1734 = vmatpush1.bf16.msra.mxu0 %v1313
      %1735 = vmatprep.subr.bf16.mxu0 0
      %1736 = vmatpush1.bf16.msra.mxu0 %v1314
      %1737 = vmatprep.mubr.bf16.mxu0 %v672
      %1738 = vmatmul.mubr.bf16.gmra.mrb[0].mxu0 %v671
      %v1739 = vpop.f32.mrb[0].mxu0
      %v1740 = vadd.f32 %v1699, %v1739
      %v1741 = vpop.f32.mrb[0].mxu0
      %v1742 = vpop.f32.mrb[0].mxu0
      %v1743 = vadd.f32 %v1702, %v1742
      %v1744 = vpop.f32.mrb[0].mxu0
      %1745 = vdwg.mxu0
      %1746 = vmatprep.subr.bf16.mxu0 0
      %1747 = vmatpush1.bf16.msra.mxu0 %v1315
      %1748 = vmatprep.subr.bf16.mxu0 0
      %1749 = vmatpush1.bf16.msra.mxu0 %v1316
      %1750 = vmatprep.subr.bf16.mxu0 0
      %1751 = vmatpush1.bf16.msra.mxu0 %v1317
      %1752 = vmatprep.subr.bf16.mxu0 0
      %1753 = vmatpush1.bf16.msra.mxu0 %v1318
      %1754 = vmatprep.subr.bf16.mxu0 0
      %1755 = vmatpush1.bf16.msra.mxu0 %v1319
      %1756 = vmatprep.subr.bf16.mxu0 0
      %1757 = vmatpush1.bf16.msra.mxu0 %v1320
      %1758 = vmatprep.subr.bf16.mxu0 0
      %1759 = vmatpush1.bf16.msra.mxu0 %v1321
      %1760 = vmatprep.subr.bf16.mxu0 0
      %1761 = vmatpush1.bf16.msra.mxu0 %v1322
      %1762 = vmatprep.subr.bf16.mxu0 0
      %1763 = vmatpush1.bf16.msra.mxu0 %v1323
      %1764 = vmatprep.subr.bf16.mxu0 0
      %1765 = vmatpush1.bf16.msra.mxu0 %v1324
      %1766 = vmatprep.subr.bf16.mxu0 0
      %1767 = vmatpush1.bf16.msra.mxu0 %v1325
      %1768 = vmatprep.subr.bf16.mxu0 0
      %1769 = vmatpush1.bf16.msra.mxu0 %v1326
      %1770 = vmatprep.subr.bf16.mxu0 0
      %1771 = vmatpush1.bf16.msra.mxu0 %v1327
      %1772 = vmatprep.subr.bf16.mxu0 0
      %1773 = vmatpush1.bf16.msra.mxu0 %v1328
      %1774 = vmatprep.subr.bf16.mxu0 0
      %1775 = vmatpush1.bf16.msra.mxu0 %v1329
      %1776 = vmatprep.subr.bf16.mxu0 0
      %1777 = vmatpush1.bf16.msra.mxu0 %v1330
      %1778 = vmatprep.mubr.bf16.mxu0 %v674
      %1779 = vmatmul.mubr.bf16.gmra.mrb[0].mxu0 %v673
      %v1780 = vpop.f32.mrb[0].mxu0
      %v1781 = vadd.f32 %v1740, %v1780
      %v1782 = vpop.f32.mrb[0].mxu0
      %v1783 = vpop.f32.mrb[0].mxu0
      %v1784 = vadd.f32 %v1743, %v1783
      %v1785 = vpop.f32.mrb[0].mxu0
      %1786 = vdwg.mxu0
      %v1787 = vpack.c.bf16 %v1784, %v1781
      %v1788 = vld [vmem:[%s5] sm:$0x1]
      %v1790 = vlaneseq
      %v1791 = vshrl.u32 %v1790, 7
      %v1792 = vsub.s32 0, %v1791
      %v1793 = vrot.slane %v1788, %v1792
      %v1795 = vadd.f32 %v1793, 0.0
      %v1796 = vld [vmem:[%s3] sm:$0xf]
      %vm1797 = vcmask 130048
      %v1799 = vsel %vm1797, %v1796, 0
      %1801 = vmatprep.subr.bf16.mxu0 0
      %1802 = vmatpush1.bf16.msra.mxu0 %v1787
      %1803 = vmatprep.subr.bf16.mxu0 0
      %1804 = vmatpush1.bf16.msra.mxu0 0
      %1805 = vmatprep.subr.bf16.mxu0 0
      %1806 = vmatpush1.bf16.msra.mxu0 0
      %1807 = vmatprep.subr.bf16.mxu0 0
      %1808 = vmatpush1.bf16.msra.mxu0 0
      %1809 = vmatprep.subr.bf16.mxu0 0
      %1810 = vmatpush1.bf16.msra.mxu0 0
      %1811 = vmatprep.subr.bf16.mxu0 0
      %1812 = vmatpush1.bf16.msra.mxu0 0
      %1813 = vmatprep.subr.bf16.mxu0 0
      %1814 = vmatpush1.bf16.msra.mxu0 0
      %1815 = vmatprep.subr.bf16.mxu0 0
      %1816 = vmatpush1.bf16.msra.mxu0 0
      %1817 = vmatprep.subr.bf16.mxu0 0
      %1818 = vmatpush1.bf16.msra.mxu0 0
      %1819 = vmatprep.subr.bf16.mxu0 0
      %1820 = vmatpush1.bf16.msra.mxu0 0
      %1821 = vmatprep.subr.bf16.mxu0 0
      %1822 = vmatpush1.bf16.msra.mxu0 0
      %1823 = vmatprep.subr.bf16.mxu0 0
      %1824 = vmatpush1.bf16.msra.mxu0 0
      %1825 = vmatprep.subr.bf16.mxu0 0
      %1826 = vmatpush1.bf16.msra.mxu0 0
      %1827 = vmatprep.subr.bf16.mxu0 0
      %1828 = vmatpush1.bf16.msra.mxu0 0
      %1829 = vmatprep.subr.bf16.mxu0 0
      %1830 = vmatpush1.bf16.msra.mxu0 0
      %1831 = vmatprep.subr.bf16.mxu0 0
      %1832 = vmatpush1.bf16.msra.mxu0 0
      %1833 = vmatprep.mubr.bf16.mxu0 0
      %1834 = vmatmul.mubr.bf16.gmra.mrb[0].mxu0 %v1799
      %v1835 = vpop.f32.mrb[0].mxu0
      %v1836 = vadd.f32 0.0, %v1835
      %v1837 = vpop.f32.mrb[0].mxu0
      %v1838 = vpop.f32.mrb[0].mxu0
      %v1839 = vpop.f32.mrb[0].mxu0
      %1840 = vdwg.mxu0
      %v1841 = vpack.c.bf16 %v1836, %v1836
      %v1842 = vld [vmem:[%s4] sm:$0xf]
      %v1843 = vld [vmem:[%s4 + $0x4] sm:$0xf]
      %v1844 = vld [vmem:[%s4 + $0x8] sm:$0xf]
      %v1845 = vld [vmem:[%s4 + $0xc] sm:$0xf]
      %v1846 = vld [vmem:[%s4 + $0x10] sm:$0xf]
      %v1847 = vld [vmem:[%s4 + $0x14] sm:$0xf]
      %v1848 = vld [vmem:[%s4 + $0x18] sm:$0xf]
      %v1849 = vld [vmem:[%s4 + $0x1c] sm:$0xf]
      %v1858 = vunpack.c.l.b16 %v1842
      %v1859 = vunpack.c.l.b16 %v1843
      %v1860 = vunpack.c.l.b16 %v1844
      %v1861 = vunpack.c.l.b16 %v1845
      %v1862 = vunpack.c.l.b16 %v1846
      %v1863 = vunpack.c.l.b16 %v1847
      %v1864 = vunpack.c.l.b16 %v1848
      %v1865 = vunpack.c.l.b16 %v1849
      %v1866 = vpack.c.b16 %v1859, %v1858
      %v1867 = vpack.c.b16 %v1861, %v1860
      %v1868 = vpack.c.b16 %v1863, %v1862
      %v1869 = vpack.c.b16 %v1865, %v1864
      %vm1874 = vcmask 523264
      %v1876 = vsel %vm1874, %v1841, 0
      %1878 = vmatprep.subr.bf16.mxu0 0
      %1879 = vmatpush1.bf16.msra.mxu0 %v1866
      %1880 = vmatprep.subr.bf16.mxu0 0
      %1881 = vmatpush1.bf16.msra.mxu0 %v1867
      %1882 = vmatprep.subr.bf16.mxu0 0
      %1883 = vmatpush1.bf16.msra.mxu0 %v1868
      %1884 = vmatprep.subr.bf16.mxu0 0
      %1885 = vmatpush1.bf16.msra.mxu0 %v1869
      %1886 = vmatprep.subr.bf16.mxu0 0
      %1887 = vmatpush1.bf16.msra.mxu0 0
      %1888 = vmatprep.subr.bf16.mxu0 0
      %1889 = vmatpush1.bf16.msra.mxu0 0
      %1890 = vmatprep.subr.bf16.mxu0 0
      %1891 = vmatpush1.bf16.msra.mxu0 0
      %1892 = vmatprep.subr.bf16.mxu0 0
      %1893 = vmatpush1.bf16.msra.mxu0 0
      %1894 = vmatprep.subr.bf16.mxu0 0
      %1895 = vmatpush1.bf16.msra.mxu0 0
      %1896 = vmatprep.subr.bf16.mxu0 0
      %1897 = vmatpush1.bf16.msra.mxu0 0
      %1898 = vmatprep.subr.bf16.mxu0 0
      %1899 = vmatpush1.bf16.msra.mxu0 0
      %1900 = vmatprep.subr.bf16.mxu0 0
      %1901 = vmatpush1.bf16.msra.mxu0 0
      %1902 = vmatprep.subr.bf16.mxu0 0
      %1903 = vmatpush1.bf16.msra.mxu0 0
      %1904 = vmatprep.subr.bf16.mxu0 0
      %1905 = vmatpush1.bf16.msra.mxu0 0
      %1906 = vmatprep.subr.bf16.mxu0 0
      %1907 = vmatpush1.bf16.msra.mxu0 0
      %1908 = vmatprep.subr.bf16.mxu0 0
      %1909 = vmatpush1.bf16.msra.mxu0 0
      %1910 = vmatprep.mubr.bf16.mxu0 0
      %1911 = vmatmul.mubr.bf16.gmra.mrb[0].mxu0 %v1876
      %v1912 = vpop.f32.mrb[0].mxu0
      %v1913 = vadd.f32 0.0, %v1912
      %v1914 = vpop.f32.mrb[0].mxu0
      %v1915 = vpop.f32.mrb[0].mxu0
      %v1916 = vpop.f32.mrb[0].mxu0
      %1917 = vdwg.mxu0
      %v1918 = vadd.f32 %v1795, %v1913
      %s1919 = scalar_lea.vmem %s3, 4
      %v1920 = vld [vmem:[%s1919] sm:$0xf]
      %v1922 = vsel %vm1797, %v1920, 0
      %1924 = vmatprep.subr.bf16.mxu0 0
      %1925 = vmatpush1.bf16.msra.mxu0 %v1787
      %1926 = vmatprep.subr.bf16.mxu0 0
      %1927 = vmatpush1.bf16.msra.mxu0 0
      %1928 = vmatprep.subr.bf16.mxu0 0
      %1929 = vmatpush1.bf16.msra.mxu0 0
      %1930 = vmatprep.subr.bf16.mxu0 0
      %1931 = vmatpush1.bf16.msra.mxu0 0
      %1932 = vmatprep.subr.bf16.mxu0 0
      %1933 = vmatpush1.bf16.msra.mxu0 0
      %1934 = vmatprep.subr.bf16.mxu0 0
      %1935 = vmatpush1.bf16.msra.mxu0 0
      %1936 = vmatprep.subr.bf16.mxu0 0
      %1937 = vmatpush1.bf16.msra.mxu0 0
      %1938 = vmatprep.subr.bf16.mxu0 0
      %1939 = vmatpush1.bf16.msra.mxu0 0
      %1940 = vmatprep.subr.bf16.mxu0 0
      %1941 = vmatpush1.bf16.msra.mxu0 0
      %1942 = vmatprep.subr.bf16.mxu0 0
      %1943 = vmatpush1.bf16.msra.mxu0 0
      %1944 = vmatprep.subr.bf16.mxu0 0
      %1945 = vmatpush1.bf16.msra.mxu0 0
      %1946 = vmatprep.subr.bf16.mxu0 0
      %1947 = vmatpush1.bf16.msra.mxu0 0
      %1948 = vmatprep.subr.bf16.mxu0 0
      %1949 = vmatpush1.bf16.msra.mxu0 0
      %1950 = vmatprep.subr.bf16.mxu0 0
      %1951 = vmatpush1.bf16.msra.mxu0 0
      %1952 = vmatprep.subr.bf16.mxu0 0
      %1953 = vmatpush1.bf16.msra.mxu0 0
      %1954 = vmatprep.subr.bf16.mxu0 0
      %1955 = vmatpush1.bf16.msra.mxu0 0
      %1956 = vmatprep.mubr.bf16.mxu0 0
      %1957 = vmatmul.mubr.bf16.gmra.mrb[0].mxu0 %v1922
      %v1958 = vpop.f32.mrb[0].mxu0
      %v1959 = vadd.f32 0.0, %v1958
      %v1960 = vpop.f32.mrb[0].mxu0
      %v1961 = vpop.f32.mrb[0].mxu0
      %v1962 = vpop.f32.mrb[0].mxu0
      %1963 = vdwg.mxu0
      %v1964 = vpack.c.bf16 %v1959, %v1959
      %s1965 = scalar_lea.vmem %s4, 32
      %v1966 = vld [vmem:[%s1965] sm:$0xf]
      %v1967 = vld [vmem:[%s1965 + $0x4] sm:$0xf]
      %v1968 = vld [vmem:[%s1965 + $0x8] sm:$0xf]
      %v1969 = vld [vmem:[%s1965 + $0xc] sm:$0xf]
      %v1970 = vld [vmem:[%s1965 + $0x10] sm:$0xf]
      %v1971 = vld [vmem:[%s1965 + $0x14] sm:$0xf]
      %v1972 = vld [vmem:[%s1965 + $0x18] sm:$0xf]
      %v1973 = vld [vmem:[%s1965 + $0x1c] sm:$0xf]
      %v1982 = vunpack.c.l.b16 %v1966
      %v1983 = vunpack.c.l.b16 %v1967
      %v1984 = vunpack.c.l.b16 %v1968
      %v1985 = vunpack.c.l.b16 %v1969
      %v1986 = vunpack.c.l.b16 %v1970
      %v1987 = vunpack.c.l.b16 %v1971
      %v1988 = vunpack.c.l.b16 %v1972
      %v1989 = vunpack.c.l.b16 %v1973
      %v1990 = vpack.c.b16 %v1983, %v1982
      %v1991 = vpack.c.b16 %v1985, %v1984
      %v1992 = vpack.c.b16 %v1987, %v1986
      %v1993 = vpack.c.b16 %v1989, %v1988
      %v1999 = vsel %vm1874, %v1964, 0
      %2001 = vmatprep.subr.bf16.mxu0 0
      %2002 = vmatpush1.bf16.msra.mxu0 %v1990
      %2003 = vmatprep.subr.bf16.mxu0 0
      %2004 = vmatpush1.bf16.msra.mxu0 %v1991
      %2005 = vmatprep.subr.bf16.mxu0 0
      %2006 = vmatpush1.bf16.msra.mxu0 %v1992
      %2007 = vmatprep.subr.bf16.mxu0 0
      %2008 = vmatpush1.bf16.msra.mxu0 %v1993
      %2009 = vmatprep.subr.bf16.mxu0 0
      %2010 = vmatpush1.bf16.msra.mxu0 0
      %2011 = vmatprep.subr.bf16.mxu0 0
      %2012 = vmatpush1.bf16.msra.mxu0 0
      %2013 = vmatprep.subr.bf16.mxu0 0
      %2014 = vmatpush1.bf16.msra.mxu0 0
      %2015 = vmatprep.subr.bf16.mxu0 0
      %2016 = vmatpush1.bf16.msra.mxu0 0
      %2017 = vmatprep.subr.bf16.mxu0 0
      %2018 = vmatpush1.bf16.msra.mxu0 0
      %2019 = vmatprep.subr.bf16.mxu0 0
      %2020 = vmatpush1.bf16.msra.mxu0 0
      %2021 = vmatprep.subr.bf16.mxu0 0
      %2022 = vmatpush1.bf16.msra.mxu0 0
      %2023 = vmatprep.subr.bf16.mxu0 0
      %2024 = vmatpush1.bf16.msra.mxu0 0
      %2025 = vmatprep.subr.bf16.mxu0 0
      %2026 = vmatpush1.bf16.msra.mxu0 0
      %2027 = vmatprep.subr.bf16.mxu0 0
      %2028 = vmatpush1.bf16.msra.mxu0 0
      %2029 = vmatprep.subr.bf16.mxu0 0
      %2030 = vmatpush1.bf16.msra.mxu0 0
      %2031 = vmatprep.subr.bf16.mxu0 0
      %2032 = vmatpush1.bf16.msra.mxu0 0
      %2033 = vmatprep.mubr.bf16.mxu0 0
      %2034 = vmatmul.mubr.bf16.gmra.mrb[0].mxu0 %v1999
      %v2035 = vpop.f32.mrb[0].mxu0
      %v2036 = vadd.f32 0.0, %v2035
      %v2037 = vpop.f32.mrb[0].mxu0
      %v2038 = vpop.f32.mrb[0].mxu0
      %v2039 = vpop.f32.mrb[0].mxu0
      %2040 = vdwg.mxu0
      %v2041 = vadd.f32 %v1918, %v2036
      %s2042 = scalar_lea.vmem %s3, 8
      %v2043 = vld [vmem:[%s2042] sm:$0xf]
      %v2045 = vsel %vm1797, %v2043, 0
      %2047 = vmatprep.subr.bf16.mxu0 0
      %2048 = vmatpush1.bf16.msra.mxu0 %v1787
      %2049 = vmatprep.subr.bf16.mxu0 0
      %2050 = vmatpush1.bf16.msra.mxu0 0
      %2051 = vmatprep.subr.bf16.mxu0 0
      %2052 = vmatpush1.bf16.msra.mxu0 0
      %2053 = vmatprep.subr.bf16.mxu0 0
      %2054 = vmatpush1.bf16.msra.mxu0 0
      %2055 = vmatprep.subr.bf16.mxu0 0
      %2056 = vmatpush1.bf16.msra.mxu0 0
      %2057 = vmatprep.subr.bf16.mxu0 0
      %2058 = vmatpush1.bf16.msra.mxu0 0
      %2059 = vmatprep.subr.bf16.mxu0 0
      %2060 = vmatpush1.bf16.msra.mxu0 0
      %2061 = vmatprep.subr.bf16.mxu0 0
      %2062 = vmatpush1.bf16.msra.mxu0 0
      %2063 = vmatprep.subr.bf16.mxu0 0
      %2064 = vmatpush1.bf16.msra.mxu0 0
      %2065 = vmatprep.subr.bf16.mxu0 0
      %2066 = vmatpush1.bf16.msra.mxu0 0
      %2067 = vmatprep.subr.bf16.mxu0 0
      %2068 = vmatpush1.bf16.msra.mxu0 0
      %2069 = vmatprep.subr.bf16.mxu0 0
      %2070 = vmatpush1.bf16.msra.mxu0 0
      %2071 = vmatprep.subr.bf16.mxu0 0
      %2072 = vmatpush1.bf16.msra.mxu0 0
      %2073 = vmatprep.subr.bf16.mxu0 0
      %2074 = vmatpush1.bf16.msra.mxu0 0
      %2075 = vmatprep.subr.bf16.mxu0 0
      %2076 = vmatpush1.bf16.msra.mxu0 0
      %2077 = vmatprep.subr.bf16.mxu0 0
      %2078 = vmatpush1.bf16.msra.mxu0 0
      %2079 = vmatprep.mubr.bf16.mxu0 0
      %2080 = vmatmul.mubr.bf16.gmra.mrb[0].mxu0 %v2045
      %v2081 = vpop.f32.mrb[0].mxu0
      %v2082 = vadd.f32 0.0, %v2081
      %v2083 = vpop.f32.mrb[0].mxu0
      %v2084 = vpop.f32.mrb[0].mxu0
      %v2085 = vpop.f32.mrb[0].mxu0
      %2086 = vdwg.mxu0
      %v2087 = vpack.c.bf16 %v2082, %v2082
      %s2088 = scalar_lea.vmem %s4, 64
      %v2089 = vld [vmem:[%s2088] sm:$0xf]
      %v2090 = vld [vmem:[%s2088 + $0x4] sm:$0xf]
      %v2091 = vld [vmem:[%s2088 + $0x8] sm:$0xf]
      %v2092 = vld [vmem:[%s2088 + $0xc] sm:$0xf]
      %v2093 = vld [vmem:[%s2088 + $0x10] sm:$0xf]
      %v2094 = vld [vmem:[%s2088 + $0x14] sm:$0xf]
      %v2095 = vld [vmem:[%s2088 + $0x18] sm:$0xf]
      %v2096 = vld [vmem:[%s2088 + $0x1c] sm:$0xf]
      %v2105 = vunpack.c.l.b16 %v2089
      %v2106 = vunpack.c.l.b16 %v2090
      %v2107 = vunpack.c.l.b16 %v2091
      %v2108 = vunpack.c.l.b16 %v2092
      %v2109 = vunpack.c.l.b16 %v2093
      %v2110 = vunpack.c.l.b16 %v2094
      %v2111 = vunpack.c.l.b16 %v2095
      %v2112 = vunpack.c.l.b16 %v2096
      %v2113 = vpack.c.b16 %v2106, %v2105
      %v2114 = vpack.c.b16 %v2108, %v2107
      %v2115 = vpack.c.b16 %v2110, %v2109
      %v2116 = vpack.c.b16 %v2112, %v2111
      %v2122 = vsel %vm1874, %v2087, 0
      %2124 = vmatprep.subr.bf16.mxu0 0
      %2125 = vmatpush1.bf16.msra.mxu0 %v2113
      %2126 = vmatprep.subr.bf16.mxu0 0
      %2127 = vmatpush1.bf16.msra.mxu0 %v2114
      %2128 = vmatprep.subr.bf16.mxu0 0
      %2129 = vmatpush1.bf16.msra.mxu0 %v2115
      %2130 = vmatprep.subr.bf16.mxu0 0
      %2131 = vmatpush1.bf16.msra.mxu0 %v2116
      %2132 = vmatprep.subr.bf16.mxu0 0
      %2133 = vmatpush1.bf16.msra.mxu0 0
      %2134 = vmatprep.subr.bf16.mxu0 0
      %2135 = vmatpush1.bf16.msra.mxu0 0
      %2136 = vmatprep.subr.bf16.mxu0 0
      %2137 = vmatpush1.bf16.msra.mxu0 0
      %2138 = vmatprep.subr.bf16.mxu0 0
      %2139 = vmatpush1.bf16.msra.mxu0 0
      %2140 = vmatprep.subr.bf16.mxu0 0
      %2141 = vmatpush1.bf16.msra.mxu0 0
      %2142 = vmatprep.subr.bf16.mxu0 0
      %2143 = vmatpush1.bf16.msra.mxu0 0
      %2144 = vmatprep.subr.bf16.mxu0 0
      %2145 = vmatpush1.bf16.msra.mxu0 0
      %2146 = vmatprep.subr.bf16.mxu0 0
      %2147 = vmatpush1.bf16.msra.mxu0 0
      %2148 = vmatprep.subr.bf16.mxu0 0
      %2149 = vmatpush1.bf16.msra.mxu0 0
      %2150 = vmatprep.subr.bf16.mxu0 0
      %2151 = vmatpush1.bf16.msra.mxu0 0
      %2152 = vmatprep.subr.bf16.mxu0 0
      %2153 = vmatpush1.bf16.msra.mxu0 0
      %2154 = vmatprep.subr.bf16.mxu0 0
      %2155 = vmatpush1.bf16.msra.mxu0 0
      %2156 = vmatprep.mubr.bf16.mxu0 0
      %2157 = vmatmul.mubr.bf16.gmra.mrb[0].mxu0 %v2122
      %v2158 = vpop.f32.mrb[0].mxu0
      %v2159 = vadd.f32 0.0, %v2158
      %v2160 = vpop.f32.mrb[0].mxu0
      %v2161 = vpop.f32.mrb[0].mxu0
      %v2162 = vpop.f32.mrb[0].mxu0
      %2163 = vdwg.mxu0
      %v2164 = vadd.f32 %v2041, %v2159
      %v2165 = vpack.c.bf16 %v2164, %v2164
      %v2166 = vld [vmem:[%s8] sm:$0x1]
      %v2168 = vlaneseq
      %v2169 = vshrl.u32 %v2168, 7
      %v2170 = vsub.s32 0, %v2169
      %v2171 = vrot.slane %v2166, %v2170
      %v2173 = vadd.f32 %v2171, 0.0
      %v2174 = vld [vmem:[%s6] sm:$0x3]
      %vm2175 = vcmask 64512
      %v2177 = vsel %vm2175, %v2174, 0
      %vm2179 = vcmask 1043456
      %v2181 = vsel %vm2179, %v2165, 0
      %2183 = vmatprep.subr.bf16.mxu0 0
      %2184 = vmatpush1.bf16.msra.mxu0 %v2181
      %2185 = vmatprep.subr.bf16.mxu0 0
      %2186 = vmatpush1.bf16.msra.mxu0 0
      %2187 = vmatprep.subr.bf16.mxu0 0
      %2188 = vmatpush1.bf16.msra.mxu0 0
      %2189 = vmatprep.subr.bf16.mxu0 0
      %2190 = vmatpush1.bf16.msra.mxu0 0
      %2191 = vmatprep.subr.bf16.mxu0 0
      %2192 = vmatpush1.bf16.msra.mxu0 0
      %2193 = vmatprep.subr.bf16.mxu0 0
      %2194 = vmatpush1.bf16.msra.mxu0 0
      %2195 = vmatprep.subr.bf16.mxu0 0
      %2196 = vmatpush1.bf16.msra.mxu0 0
      %2197 = vmatprep.subr.bf16.mxu0 0
      %2198 = vmatpush1.bf16.msra.mxu0 0
      %2199 = vmatprep.subr.bf16.mxu0 0
      %2200 = vmatpush1.bf16.msra.mxu0 0
      %2201 = vmatprep.subr.bf16.mxu0 0
      %2202 = vmatpush1.bf16.msra.mxu0 0
      %2203 = vmatprep.subr.bf16.mxu0 0
      %2204 = vmatpush1.bf16.msra.mxu0 0
      %2205 = vmatprep.subr.bf16.mxu0 0
      %2206 = vmatpush1.bf16.msra.mxu0 0
      %2207 = vmatprep.subr.bf16.mxu0 0
      %2208 = vmatpush1.bf16.msra.mxu0 0
      %2209 = vmatprep.subr.bf16.mxu0 0
      %2210 = vmatpush1.bf16.msra.mxu0 0
      %2211 = vmatprep.subr.bf16.mxu0 0
      %2212 = vmatpush1.bf16.msra.mxu0 0
      %2213 = vmatprep.subr.bf16.mxu0 0
      %2214 = vmatpush1.bf16.msra.mxu0 0
      %2215 = vmatprep.mubr.bf16.mxu0 0
      %2216 = vmatmul.mubr.bf16.gmra.mrb[0].mxu0 %v2177
      %v2217 = vpop.f32.mrb[0].mxu0
      %v2218 = vadd.f32 0.0, %v2217
      %v2219 = vpop.f32.mrb[0].mxu0
      %v2220 = vpop.f32.mrb[0].mxu0
      %v2221 = vpop.f32.mrb[0].mxu0
      %2222 = vdwg.mxu0
      %v2223 = vpack.c.bf16 %v2218, %v2218
      %v2224 = vld [vmem:[%s7] sm:$0xf]
      %v2225 = vld [vmem:[%s7 + $0x4] sm:$0xf]
      %v2226 = vld [vmem:[%s7 + $0x8] sm:$0xf]
      %v2227 = vld [vmem:[%s7 + $0xc] sm:$0xf]
      %v2232 = vunpack.c.l.b16 %v2224
      %v2233 = vunpack.c.l.b16 %v2225
      %v2234 = vunpack.c.l.b16 %v2226
      %v2235 = vunpack.c.l.b16 %v2227
      %v2236 = vpack.c.b16 %v2233, %v2232
      %v2237 = vpack.c.b16 %v2235, %v2234
      %vm2240 = vcmask 261120
      %v2242 = vsel %vm2240, %v2223, 0
      %2244 = vmatprep.subr.bf16.mxu0 0
      %2245 = vmatpush1.bf16.msra.mxu0 %v2236
      %2246 = vmatprep.subr.bf16.mxu0 0
      %2247 = vmatpush1.bf16.msra.mxu0 %v2237
      %2248 = vmatprep.subr.bf16.mxu0 0
      %2249 = vmatpush1.bf16.msra.mxu0 0
      %2250 = vmatprep.subr.bf16.mxu0 0
      %2251 = vmatpush1.bf16.msra.mxu0 0
      %2252 = vmatprep.subr.bf16.mxu0 0
      %2253 = vmatpush1.bf16.msra.mxu0 0
      %2254 = vmatprep.subr.bf16.mxu0 0
      %2255 = vmatpush1.bf16.msra.mxu0 0
      %2256 = vmatprep.subr.bf16.mxu0 0
      %2257 = vmatpush1.bf16.msra.mxu0 0
      %2258 = vmatprep.subr.bf16.mxu0 0
      %2259 = vmatpush1.bf16.msra.mxu0 0
      %2260 = vmatprep.subr.bf16.mxu0 0
      %2261 = vmatpush1.bf16.msra.mxu0 0
      %2262 = vmatprep.subr.bf16.mxu0 0
      %2263 = vmatpush1.bf16.msra.mxu0 0
      %2264 = vmatprep.subr.bf16.mxu0 0
      %2265 = vmatpush1.bf16.msra.mxu0 0
      %2266 = vmatprep.subr.bf16.mxu0 0
      %2267 = vmatpush1.bf16.msra.mxu0 0
      %2268 = vmatprep.subr.bf16.mxu0 0
      %2269 = vmatpush1.bf16.msra.mxu0 0
      %2270 = vmatprep.subr.bf16.mxu0 0
      %2271 = vmatpush1.bf16.msra.mxu0 0
      %2272 = vmatprep.subr.bf16.mxu0 0
      %2273 = vmatpush1.bf16.msra.mxu0 0
      %2274 = vmatprep.subr.bf16.mxu0 0
      %2275 = vmatpush1.bf16.msra.mxu0 0
      %2276 = vmatprep.mubr.bf16.mxu0 0
      %2277 = vmatmul.mubr.bf16.gmra.mrb[0].mxu0 %v2242
      %v2278 = vpop.f32.mrb[0].mxu0
      %v2279 = vadd.f32 0.0, %v2278
      %v2280 = vpop.f32.mrb[0].mxu0
      %v2281 = vpop.f32.mrb[0].mxu0
      %v2282 = vpop.f32.mrb[0].mxu0
      %2283 = vdwg.mxu0
      %v2284 = vadd.f32 %v2173, %v2279
      %s2285 = scalar_lea.vmem %s6, 2
      %v2286 = vld [vmem:[%s2285] sm:$0x3]
      %v2288 = vsel %vm2175, %v2286, 0
      %2290 = vmatprep.subr.bf16.mxu0 0
      %2291 = vmatpush1.bf16.msra.mxu0 %v2181
      %2292 = vmatprep.subr.bf16.mxu0 0
      %2293 = vmatpush1.bf16.msra.mxu0 0
      %2294 = vmatprep.subr.bf16.mxu0 0
      %2295 = vmatpush1.bf16.msra.mxu0 0
      %2296 = vmatprep.subr.bf16.mxu0 0
      %2297 = vmatpush1.bf16.msra.mxu0 0
      %2298 = vmatprep.subr.bf16.mxu0 0
      %2299 = vmatpush1.bf16.msra.mxu0 0
      %2300 = vmatprep.subr.bf16.mxu0 0
      %2301 = vmatpush1.bf16.msra.mxu0 0
      %2302 = vmatprep.subr.bf16.mxu0 0
      %2303 = vmatpush1.bf16.msra.mxu0 0
      %2304 = vmatprep.subr.bf16.mxu0 0
      %2305 = vmatpush1.bf16.msra.mxu0 0
      %2306 = vmatprep.subr.bf16.mxu0 0
      %2307 = vmatpush1.bf16.msra.mxu0 0
      %2308 = vmatprep.subr.bf16.mxu0 0
      %2309 = vmatpush1.bf16.msra.mxu0 0
      %2310 = vmatprep.subr.bf16.mxu0 0
      %2311 = vmatpush1.bf16.msra.mxu0 0
      %2312 = vmatprep.subr.bf16.mxu0 0
      %2313 = vmatpush1.bf16.msra.mxu0 0
      %2314 = vmatprep.subr.bf16.mxu0 0
      %2315 = vmatpush1.bf16.msra.mxu0 0
      %2316 = vmatprep.subr.bf16.mxu0 0
      %2317 = vmatpush1.bf16.msra.mxu0 0
      %2318 = vmatprep.subr.bf16.mxu0 0
      %2319 = vmatpush1.bf16.msra.mxu0 0
      %2320 = vmatprep.subr.bf16.mxu0 0
      %2321 = vmatpush1.bf16.msra.mxu0 0
      %2322 = vmatprep.mubr.bf16.mxu0 0
      %2323 = vmatmul.mubr.bf16.gmra.mrb[0].mxu0 %v2288
      %v2324 = vpop.f32.mrb[0].mxu0
      %v2325 = vadd.f32 0.0, %v2324
      %v2326 = vpop.f32.mrb[0].mxu0
      %v2327 = vpop.f32.mrb[0].mxu0
      %v2328 = vpop.f32.mrb[0].mxu0
      %2329 = vdwg.mxu0
      %v2330 = vpack.c.bf16 %v2325, %v2325
      %s2331 = scalar_lea.vmem %s7, 16
      %v2332 = vld [vmem:[%s2331] sm:$0xf]
      %v2333 = vld [vmem:[%s2331 + $0x4] sm:$0xf]
      %v2334 = vld [vmem:[%s2331 + $0x8] sm:$0xf]
      %v2335 = vld [vmem:[%s2331 + $0xc] sm:$0xf]
      %v2340 = vunpack.c.l.b16 %v2332
      %v2341 = vunpack.c.l.b16 %v2333
      %v2342 = vunpack.c.l.b16 %v2334
      %v2343 = vunpack.c.l.b16 %v2335
      %v2344 = vpack.c.b16 %v2341, %v2340
      %v2345 = vpack.c.b16 %v2343, %v2342
      %v2349 = vsel %vm2240, %v2330, 0
      %2351 = vmatprep.subr.bf16.mxu0 0
      %2352 = vmatpush1.bf16.msra.mxu0 %v2344
      %2353 = vmatprep.subr.bf16.mxu0 0
      %2354 = vmatpush1.bf16.msra.mxu0 %v2345
      %2355 = vmatprep.subr.bf16.mxu0 0
      %2356 = vmatpush1.bf16.msra.mxu0 0
      %2357 = vmatprep.subr.bf16.mxu0 0
      %2358 = vmatpush1.bf16.msra.mxu0 0
      %2359 = vmatprep.subr.bf16.mxu0 0
      %2360 = vmatpush1.bf16.msra.mxu0 0
      %2361 = vmatprep.subr.bf16.mxu0 0
      %2362 = vmatpush1.bf16.msra.mxu0 0
      %2363 = vmatprep.subr.bf16.mxu0 0
      %2364 = vmatpush1.bf16.msra.mxu0 0
      %2365 = vmatprep.subr.bf16.mxu0 0
      %2366 = vmatpush1.bf16.msra.mxu0 0
      %2367 = vmatprep.subr.bf16.mxu0 0
      %2368 = vmatpush1.bf16.msra.mxu0 0
      %2369 = vmatprep.subr.bf16.mxu0 0
      %2370 = vmatpush1.bf16.msra.mxu0 0
      %2371 = vmatprep.subr.bf16.mxu0 0
      %2372 = vmatpush1.bf16.msra.mxu0 0
      %2373 = vmatprep.subr.bf16.mxu0 0
      %2374 = vmatpush1.bf16.msra.mxu0 0
      %2375 = vmatprep.subr.bf16.mxu0 0
      %2376 = vmatpush1.bf16.msra.mxu0 0
      %2377 = vmatprep.subr.bf16.mxu0 0
      %2378 = vmatpush1.bf16.msra.mxu0 0
      %2379 = vmatprep.subr.bf16.mxu0 0
      %2380 = vmatpush1.bf16.msra.mxu0 0
      %2381 = vmatprep.subr.bf16.mxu0 0
      %2382 = vmatpush1.bf16.msra.mxu0 0
      %2383 = vmatprep.mubr.bf16.mxu0 0
      %2384 = vmatmul.mubr.bf16.gmra.mrb[0].mxu0 %v2349
      %v2385 = vpop.f32.mrb[0].mxu0
      %v2386 = vadd.f32 0.0, %v2385
      %v2387 = vpop.f32.mrb[0].mxu0
      %v2388 = vpop.f32.mrb[0].mxu0
      %v2389 = vpop.f32.mrb[0].mxu0
      %2390 = vdwg.mxu0
      %v2391 = vadd.f32 %v2284, %v2386
      %s2392 = scalar_lea.vmem %s6, 4
      %v2393 = vld [vmem:[%s2392] sm:$0x3]
      %v2395 = vsel %vm2175, %v2393, 0
      %2397 = vmatprep.subr.bf16.mxu0 0
      %2398 = vmatpush1.bf16.msra.mxu0 %v2181
      %2399 = vmatprep.subr.bf16.mxu0 0
      %2400 = vmatpush1.bf16.msra.mxu0 0
      %2401 = vmatprep.subr.bf16.mxu0 0
      %2402 = vmatpush1.bf16.msra.mxu0 0
      %2403 = vmatprep.subr.bf16.mxu0 0
      %2404 = vmatpush1.bf16.msra.mxu0 0
      %2405 = vmatprep.subr.bf16.mxu0 0
      %2406 = vmatpush1.bf16.msra.mxu0 0
      %2407 = vmatprep.subr.bf16.mxu0 0
      %2408 = vmatpush1.bf16.msra.mxu0 0
      %2409 = vmatprep.subr.bf16.mxu0 0
      %2410 = vmatpush1.bf16.msra.mxu0 0
      %2411 = vmatprep.subr.bf16.mxu0 0
      %2412 = vmatpush1.bf16.msra.mxu0 0
      %2413 = vmatprep.subr.bf16.mxu0 0
      %2414 = vmatpush1.bf16.msra.mxu0 0
      %2415 = vmatprep.subr.bf16.mxu0 0
      %2416 = vmatpush1.bf16.msra.mxu0 0
      %2417 = vmatprep.subr.bf16.mxu0 0
      %2418 = vmatpush1.bf16.msra.mxu0 0
      %2419 = vmatprep.subr.bf16.mxu0 0
      %2420 = vmatpush1.bf16.msra.mxu0 0
      %2421 = vmatprep.subr.bf16.mxu0 0
      %2422 = vmatpush1.bf16.msra.mxu0 0
      %2423 = vmatprep.subr.bf16.mxu0 0
      %2424 = vmatpush1.bf16.msra.mxu0 0
      %2425 = vmatprep.subr.bf16.mxu0 0
      %2426 = vmatpush1.bf16.msra.mxu0 0
      %2427 = vmatprep.subr.bf16.mxu0 0
      %2428 = vmatpush1.bf16.msra.mxu0 0
      %2429 = vmatprep.mubr.bf16.mxu0 0
      %2430 = vmatmul.mubr.bf16.gmra.mrb[0].mxu0 %v2395
      %v2431 = vpop.f32.mrb[0].mxu0
      %v2432 = vadd.f32 0.0, %v2431
      %v2433 = vpop.f32.mrb[0].mxu0
      %v2434 = vpop.f32.mrb[0].mxu0
      %v2435 = vpop.f32.mrb[0].mxu0
      %2436 = vdwg.mxu0
      %v2437 = vpack.c.bf16 %v2432, %v2432
      %s2438 = scalar_lea.vmem %s7, 32
      %v2439 = vld [vmem:[%s2438] sm:$0xf]
      %v2440 = vld [vmem:[%s2438 + $0x4] sm:$0xf]
      %v2441 = vld [vmem:[%s2438 + $0x8] sm:$0xf]
      %v2442 = vld [vmem:[%s2438 + $0xc] sm:$0xf]
      %v2447 = vunpack.c.l.b16 %v2439
      %v2448 = vunpack.c.l.b16 %v2440
      %v2449 = vunpack.c.l.b16 %v2441
      %v2450 = vunpack.c.l.b16 %v2442
      %v2451 = vpack.c.b16 %v2448, %v2447
      %v2452 = vpack.c.b16 %v2450, %v2449
      %v2456 = vsel %vm2240, %v2437, 0
      %2458 = vmatprep.subr.bf16.mxu0 0
      %2459 = vmatpush1.bf16.msra.mxu0 %v2451
      %2460 = vmatprep.subr.bf16.mxu0 0
      %2461 = vmatpush1.bf16.msra.mxu0 %v2452
      %2462 = vmatprep.subr.bf16.mxu0 0
      %2463 = vmatpush1.bf16.msra.mxu0 0
      %2464 = vmatprep.subr.bf16.mxu0 0
      %2465 = vmatpush1.bf16.msra.mxu0 0
      %2466 = vmatprep.subr.bf16.mxu0 0
      %2467 = vmatpush1.bf16.msra.mxu0 0
      %2468 = vmatprep.subr.bf16.mxu0 0
      %2469 = vmatpush1.bf16.msra.mxu0 0
      %2470 = vmatprep.subr.bf16.mxu0 0
      %2471 = vmatpush1.bf16.msra.mxu0 0
      %2472 = vmatprep.subr.bf16.mxu0 0
      %2473 = vmatpush1.bf16.msra.mxu0 0
      %2474 = vmatprep.subr.bf16.mxu0 0
      %2475 = vmatpush1.bf16.msra.mxu0 0
      %2476 = vmatprep.subr.bf16.mxu0 0
      %2477 = vmatpush1.bf16.msra.mxu0 0
      %2478 = vmatprep.subr.bf16.mxu0 0
      %2479 = vmatpush1.bf16.msra.mxu0 0
      %2480 = vmatprep.subr.bf16.mxu0 0
      %2481 = vmatpush1.bf16.msra.mxu0 0
      %2482 = vmatprep.subr.bf16.mxu0 0
      %2483 = vmatpush1.bf16.msra.mxu0 0
      %2484 = vmatprep.subr.bf16.mxu0 0
      %2485 = vmatpush1.bf16.msra.mxu0 0
      %2486 = vmatprep.subr.bf16.mxu0 0
      %2487 = vmatpush1.bf16.msra.mxu0 0
      %2488 = vmatprep.subr.bf16.mxu0 0
      %2489 = vmatpush1.bf16.msra.mxu0 0
      %2490 = vmatprep.mubr.bf16.mxu0 0
      %2491 = vmatmul.mubr.bf16.gmra.mrb[0].mxu0 %v2456
      %v2492 = vpop.f32.mrb[0].mxu0
      %v2493 = vadd.f32 0.0, %v2492
      %v2494 = vpop.f32.mrb[0].mxu0
      %v2495 = vpop.f32.mrb[0].mxu0
      %v2496 = vpop.f32.mrb[0].mxu0
      %2497 = vdwg.mxu0
      %v2498 = vadd.f32 %v2391, %v2493
      %vm2499 = vcmask 125952
      %2500 = vst.msk [vmem:[%s330] sm:$0xf] %vm2499, %v2498
      %p2501 = scmp.lt.s32.totalorder %s20, 1
      %s2502 = scalar_select %p2501, %s20, 1
      %s2503 = smul.addr %s2502, 4
      %s2504 = scalar_lea.vmem %s9, %s2503
      // Predicated region
      $region57: #{downsample_forward.1} parent=55 // pred_check
        %p2505 = pneg %p232
      $region58: #{downsample_forward.1} parent=55 // pred_check_branch
        %2507 = sbr.rel (%p2505) target = $region60
      $region59: #{downsample_forward.1} parent=55 // pred_region
        _
      $region60: #{downsample_forward.1} parent=55 // pred_fallthru
        _
    $region56: #{downsample_forward.1} parent=5 // pred_fallthru
      _
    %p2508 = scmp.le.s32.totalorder 2, %s15
    // Predicated region
    $region61: #{downsample_forward.1} parent=5 // pred_check
      %p2509 = pneg %p2508
    $region62: #{downsample_forward.1} parent=5 // pred_check_branch
      %2511 = sbr.rel (%p2509) target = $region64
    $region63: #{downsample_forward.1} parent=5 // pred_region
      %s2512 = ssub.s32 %s15, 2
      // Predicated region
      $region65: #{downsample_forward.1} parent=63 // pred_check
        %p2513 = pneg %p238
      $region66: #{downsample_forward.1} parent=63 // pred_check_branch
        %2515 = sbr.rel (%p2513) target = $region68
      $region67: #{downsample_forward.1} parent=63 // pred_region
        %p2516 = scmp.lt.s32.totalorder %s21, 1
        %s2517 = scalar_select %p2516, %s21, 1
        %s2518 = smul.addr %s2517, 4
        %s2519 = scalar_lea.vmem %s9, %s2518
      $region68: #{downsample_forward.1} parent=63 // pred_fallthru
        _
    $region64: #{downsample_forward.1} parent=5 // pred_fallthru
      _
  $region6: #{downsample_forward.1} parent=0 // loop_footer
    %s19 = sadd.s32 1, %s15
  $region7: #{downsample_forward.1} parent=0 // loop_footer_branch
    %14 = sbr.rel target = $region3
  $region8: #{downsample_forward.1} parent=0 // loop_exit
    _

</llo_original>
